<compile_context>
chip_gen: v7x
topology: tpu7x:2x2x1
jax: 0.10.0
libtpu: 0.0.40
codegen_flags: <defaults>
</compile_context>

<pallas_src>
import functools

import numpy as np

import jax
import jax.numpy as jnp
from jax import lax
from jax.experimental import pallas as pl
from jax.experimental.pallas import tpu as pltpu

P = 128          # padded feature width (one full lane tile)
NUM_LAYERS = 10  # packed matmul slots


# ---------------------------------------------------------------------------
# Kernel
# ---------------------------------------------------------------------------
def vae_kernel(data_ref, w_ref, b_ref, out_ref, *, x_dim, i_dim, z_dim):
    f32, bf16 = jnp.float32, jnp.bfloat16
    lv_lo = x_dim + i_dim          # eps / logvar lanes: [lv_lo, lv_lo + z)
    mu_lo = lv_lo + z_dim          # mu lanes:           [mu_lo, mu_lo + z)

    def dense(act, layer, relu=True):
        y = jnp.dot(act.astype(bf16), w_ref[layer],
                    preferred_element_type=f32) + b_ref[layer]
        return jnp.maximum(y, 0.0) if relu else y

    data = data_ref[...]                       # (TB,128) bf16: [X | I | eps | 0...]

    # ---- encoder (parallel X / I branches fused block-diagonally) ----
    h = dense(data, 0)             # Linear(x,64)|Linear(i,64) + ReLU -> cols 0:64 | 64:128
    xi = dense(h, 1)               # Linear(64,32)|Linear(64,32) + ReLU -> xi @ cols 0:64
    h = dense(xi, 2)               # Linear(64,48) + ReLU
    h = dense(h, 3)                # Linear(48,32) + ReLU
    mv = dense(h, 4, relu=False)   # Linear(32,2z): logvar @ eps lanes, mu @ mu lanes

    # ---- reparameterize + build the single fused decoder-stage-1 operand ----
    lane = lax.broadcasted_iota(jnp.int32, (1, P), 1)
    lv_mask = (lane >= lv_lo) & (lane < lv_lo + z_dim)
    mu_mask = (lane >= mu_lo) & (lane < mu_lo + z_dim)

    lv_only = jnp.where(lv_mask, mv, 0.0)      # exact 0 off the logvar lanes (NaN-safe)
    std = jnp.exp(0.5 * lv_only)               # std on logvar lanes, exactly 1.0 elsewhere
    # data * std: X,I pass through (*1.0), eps lanes become eps*std, padding stays 0.
    dec_in = data.astype(f32) * std + jnp.where(mu_mask, mv, 0.0)
    # dec_in lanes: X@[0,x)  I@[x,x+i)  eps*std@[lv_lo,lv_lo+z)  mu@[mu_lo,mu_lo+z)

    # ---- decoder ----
    # Stage 1 fused to ONE matmul: Z@w8 = mu@w8 + (eps*std)@w8 (w8 packed on both row
    # ranges) and I@w10 on its own rows -> z-branch @ cols 0:32, i-branch @ cols 32:96.
    h = dense(dec_in, 5)
    zi = dense(h, 6)               # Linear(32,16)|Linear(64,16) + ReLU -> zi @ cols 0:32
    h = dense(zi, 7)               # Linear(32,32) + ReLU
    h = dense(h, 8)                # Linear(32,64) + ReLU
    recon = dense(h, 9, relu=False)   # Linear(64,x): recon @ cols 0:x

    # recon @ [0,x) and mv @ [lv_lo, mu_lo+z) are disjoint -> one dense 128-lane store.
    out_ref[...] = recon + mv


# ---------------------------------------------------------------------------
# Parameter generation & packing
# ---------------------------------------------------------------------------
def init_params(key, x_dim, i_dim, z_dim):
    """Per-layer params. Weights stored as (in, out), biases as (out,)."""
    xi_f, zi_f = 32, 16
    layer_dims = [
        (x_dim, 64), (64, xi_f),                     # extract_x_features
        (i_dim, 64), (64, xi_f),                     # extract_i_features_1
        (2 * xi_f, 48), (48, 32), (32, 2 * z_dim),   # get_mu_variance
        (z_dim, 32), (32, zi_f),                     # extract_z_features
        (i_dim, 64), (64, zi_f),                     # extract_i_features_2
        (2 * zi_f, 32), (32, 64), (64, x_dim),       # reconstruct_x
    ]
    params = []
    keys = jax.random.split(key, len(layer_dims))
    for k, (din, dout) in zip(keys, layer_dims):
        kw, kb = jax.random.split(k)
        params.append(jax.random.normal(kw, (din, dout), jnp.float32) * 0.1)
        params.append(jax.random.normal(kb, (dout,), jnp.float32) * 0.01)
    return params


def pack_params(params, x_dim, i_dim, z_dim):
    """Pack 14 layers into zero-padded (10,128,128) bf16 weights + (10,1,128) f32 biases."""
    (w1, b1, w2, b2, w3, b3, w4, b4, w5, b5, w6, b6, w7, b7,
     w8, b8, w9, b9, w10, b10, w11, b11, w12, b12, w13, b13, w14, b14) = [
        np.asarray(p, np.float32) for p in params]
    xi_f, zi_f = 32, 16
    x, i, z = x_dim, i_dim, z_dim
    lv_lo, mu_lo = x + i, x + i + z
    assert mu_lo + z <= P, "x_dim + i_dim + 2*z_dim must fit in 128 lanes"
    assert i <= 64

    W = np.zeros((NUM_LAYERS, P, P), np.float32)
    B = np.zeros((NUM_LAYERS, 1, P), np.float32)

    # L0: encoder stage 1, block-diag(w1, w3): X -> cols 0:64, I -> cols 64:128
    W[0, 0:x, 0:64] = w1;                 B[0, 0, 0:64] = b1
    W[0, x:x + i, 64:128] = w3;           B[0, 0, 64:128] = b3
    # L1: encoder stage 2, block-diag(w2, w4) -> xi = [x_feat | i_feat] @ cols 0:64
    W[1, 0:64, 0:xi_f] = w2;              B[1, 0, 0:xi_f] = b2
    W[1, 64:128, xi_f:2 * xi_f] = w4;     B[1, 0, xi_f:2 * xi_f] = b4
    # L2..L4: get_mu_variance; mu -> mu lanes, logvar -> eps lanes (no roll needed later)
    W[2, 0:2 * xi_f, 0:48] = w5;          B[2, 0, 0:48] = b5
    W[3, 0:48, 0:32] = w6;                B[3, 0, 0:32] = b6
    W[4, 0:32, mu_lo:mu_lo + z] = w7[:, 0:z];      B[4, 0, mu_lo:mu_lo + z] = b7[0:z]
    W[4, 0:32, lv_lo:lv_lo + z] = w7[:, z:2 * z];  B[4, 0, lv_lo:lv_lo + z] = b7[z:2 * z]
    # L5: decoder stage 1 fused into a SINGLE matmul
    W[5, mu_lo:mu_lo + z, 0:32] = w8      # mu rows      -> z-branch
    W[5, lv_lo:lv_lo + z, 0:32] = w8      # eps*std rows -> z-branch (linearity of Z@w8)
    W[5, x:x + i, 32:96] = w10            # I rows       -> i-branch
    B[5, 0, 0:32] = b8;                   B[5, 0, 32:96] = b10
    # L6: decoder stage 2, block-diag(w9, w11) -> zi = [z_feat | i_feat] @ cols 0:32
    W[6, 0:32, 0:zi_f] = w9;              B[6, 0, 0:zi_f] = b9
    W[6, 32:96, zi_f:2 * zi_f] = w11;     B[6, 0, zi_f:2 * zi_f] = b11
    # L7..L9: reconstruct_x; recon @ cols [0, x)
    W[7, 0:2 * zi_f, 0:32] = w12;         B[7, 0, 0:32] = b12
    W[8, 0:32, 0:64] = w13;               B[8, 0, 0:64] = b13
    W[9, 0:64, 0:x] = w14;                B[9, 0, 0:x] = b14

    # TODO(synk): on v7x, pack W as float8_e4m3 (native MXU dtype there) to halve the
    # resident weight DMA; kept bf16 here for portability to v5e/v6e.
    return jnp.asarray(W, jnp.bfloat16), jnp.asarray(B, jnp.float32)


# ---------------------------------------------------------------------------
# Wrapper
# ---------------------------------------------------------------------------
def _round_up(v, m):
    return ((v + m - 1) // m) * m


def _choose_tile(batch, tb):
    """Large batch tiles amortize per-grid-step overhead and MXU weight reloads;
    when the whole batch fits in one tile, split it in two so the "parallel" grid
    axis can still be sharded across v7x's two TensorCores."""
    tb = max(16, (int(tb) // 16) * 16)
    b16 = _round_up(batch, 16)
    if b16 <= tb:
        tb = 16 if b16 <= 16 else _round_up(b16 // 2, 16)
    return tb, _round_up(batch, tb)


def vae_forward(inputs, eps, w_packed, b_packed, *, x_dim, i_dim, z_dim, tb=512):
    B, d = inputs.shape
    assert d == x_dim + i_dim
    tb, Bp = _choose_tile(B, tb)

    # Single bf16 128-lane input slab: [X | I | eps | 0...]  (4x fewer bytes than the
    # previous (Bp, 256) f32 slab; one fused pad/concat).
    # TODO(synk): pass inputs/eps as separately tiled operands (or allow_input_fusion)
    # to remove this wrapper-side HBM round trip entirely.
    slab = jnp.concatenate([inputs, eps], axis=1).astype(jnp.bfloat16)
    data = jnp.pad(slab, ((0, Bp - B), (0, P - slab.shape[1])))

    kernel = functools.partial(vae_kernel, x_dim=x_dim, i_dim=i_dim, z_dim=z_dim)
    out = pl.pallas_call(
        kernel,
        out_shape=jax.ShapeDtypeStruct((Bp, P), jnp.float32),
        grid=(Bp // tb,),
        in_specs=[
            pl.BlockSpec((tb, P), lambda i: (i, 0)),             # data: batch-tiled
            pl.BlockSpec(w_packed.shape, lambda i: (0, 0, 0)),   # weights: VMEM-resident
            pl.BlockSpec(b_packed.shape, lambda i: (0, 0, 0)),   # biases:  VMEM-resident
        ],
        out_specs=pl.BlockSpec((tb, P), lambda i: (i, 0)),
        compiler_params=pltpu.CompilerParams(
            dimension_semantics=("parallel",),    # megacore sharding on v7x
            vmem_limit_bytes=32 * 1024 * 1024,    # headroom for very large tb on v5e
        ),
    )(data, w_packed, b_packed)

    recon = out[:B, :x_dim]
    logvar = out[:B, x_dim + i_dim:x_dim + i_dim + z_dim]
    mu = out[:B, x_dim + i_dim + z_dim:x_dim + i_dim + 2 * z_dim]
    return recon, mu, logvar


# ---------------------------------------------------------------------------
# Demo + correctness check
# ---------------------------------------------------------------------------
if __name__ == "__main__":
    x_dim, i_dim, z_dim = 8, 8, 4
    Bsz = 128

    key = jax.random.PRNGKey(0)
    k_inp, k_eps, k_par = jax.random.split(key, 3)

    inputs = jax.random.normal(k_inp, (Bsz, x_dim + i_dim), jnp.float32)
    eps = jax.random.normal(k_eps, (Bsz, z_dim), jnp.float32)   # torch.randn_like(std)
    params = init_params(k_par, x_dim, i_dim, z_dim)
    w_packed, b_packed = pack_params(params, x_dim, i_dim, z_dim)

    recon_x, mu, logvar = vae_forward(inputs, eps, w_packed, b_packed,
                                      x_dim=x_dim, i_dim=i_dim, z_dim=z_dim)
    jax.block_until_ready((recon_x, mu, logvar))

    # Pure-JAX reference following the ORIGINAL module structure (encode ->
    # reparameterize -> decode with concats/chunk), mirroring the bf16 matmul
    # operands / f32 accumulation used by the kernel.
    def ref_forward(inputs, eps, params):
        bf = lambda a: a.astype(jnp.bfloat16)
        def lin(xv, w, b):
            return jnp.dot(bf(xv), bf(w), preferred_element_type=jnp.float32) + b
        relu = lambda v: jnp.maximum(v, 0.0)
        (w1, b1, w2, b2, w3, b3, w4, b4, w5, b5, w6, b6, w7, b7,
         w8, b8, w9, b9, w10, b10, w11, b11, w12, b12, w13, b13, w14, b14) = params
        X, I = inputs[:, :x_dim], inputs[:, x_dim:]
        xf = relu(lin(relu(lin(X, w1, b1)), w2, b2))
        if1 = relu(lin(relu(lin(I, w3, b3)), w4, b4))
        xi = jnp.concatenate([xf, if1], axis=1)
        h = relu(lin(relu(lin(xi, w5, b5)), w6, b6))
        mv = lin(h, w7, b7)
        mu_, lv_ = mv[:, :z_dim], mv[:, z_dim:]
        Z = mu_ + eps * jnp.exp(0.5 * lv_)
        zf = relu(lin(relu(lin(Z, w8, b8)), w9, b9))
        if2 = relu(lin(relu(lin(I, w10, b10)), w11, b11))
        zi = jnp.concatenate([zf, if2], axis=1)
        rx = lin(relu(lin(relu(lin(zi, w12, b12)), w13, b13)), w14, b14)
        return rx, mu_, lv_

    r_ref, mu_ref, lv_ref = ref_forward(inputs, eps, params)
    assert jnp.allclose(recon_x, r_ref, atol=2e-2, rtol=5e-2), "recon mismatch"
    assert jnp.allclose(mu, mu_ref, atol=2e-2, rtol=5e-2), "mu mismatch"
    assert jnp.allclose(logvar, lv_ref, atol=2e-2, rtol=5e-2), "logvar mismatch"

    print("KERNEL_OK")
</pallas_src>

<mosaic_0001>
module attributes {stable_mosaic.version = 11 : i64} {
  func.func @vae_kernel(%arg0: i32, %arg1: memref<64x128xbf16, #tpu.memory_space<vmem>>, %arg2: memref<10x128x128xbf16, #tpu.memory_space<vmem>>, %arg3: memref<10x1x128xf32, #tpu.memory_space<vmem>>, %arg4: memref<64x128xf32, #tpu.memory_space<vmem>>) attributes {dimension_semantics = [#tpu.dimension_semantics<parallel>], iteration_bounds = array<i64: 2>, scalar_prefetch = 0 : i64, scratch_operands = 0 : i64, tpu.core_type = #tpu.core_type<tc>, window_params = [{transform_indices = @transform_0, window_bounds = array<i64: 64, 128>}, {pipeline_mode = #tpu.pipeline_mode<synchronous>, transform_indices = @transform_1, window_bounds = array<i64: 10, 128, 128>}, {pipeline_mode = #tpu.pipeline_mode<synchronous>, transform_indices = @transform_2, window_bounds = array<i64: 10, 1, 128>}, {transform_indices = @transform_3, window_bounds = array<i64: 64, 128>}]} {
    %c0 = arith.constant 0 : index
    %c0_0 = arith.constant 0 : index
    %0 = vector.load %arg1[%c0, %c0_0] : memref<64x128xbf16, #tpu.memory_space<vmem>>, vector<64x128xbf16>
    %c0_1 = arith.constant 0 : index
    %c0_2 = arith.constant 0 : index
    %c0_3 = arith.constant 0 : index
    %1 = vector.load %arg2[%c0_1, %c0_2, %c0_3] : memref<10x128x128xbf16, #tpu.memory_space<vmem>>, vector<1x128x128xbf16>
    %2 = vector.shape_cast %1 : vector<1x128x128xbf16> to vector<128x128xbf16>
    %cst = arith.constant dense<0.000000e+00> : vector<64x128xf32>
    %3 = tpu.matmul %0, %2, %cst {dimension_numbers = #tpu.dot_dimension_numbers<[1], [0], [0], [1], [0, 0, 1, 1], [], []>} : vector<64x128xbf16>, vector<128x128xbf16>, vector<64x128xf32> -> vector<64x128xf32>
    %c0_4 = arith.constant 0 : index
    %c0_5 = arith.constant 0 : index
    %c0_6 = arith.constant 0 : index
    %4 = vector.load %arg3[%c0_4, %c0_5, %c0_6] : memref<10x1x128xf32, #tpu.memory_space<vmem>>, vector<1x1x128xf32>
    %5 = vector.shape_cast %4 : vector<1x1x128xf32> to vector<1x128xf32>
    %6 = vector.broadcast %5 : vector<1x128xf32> to vector<64x128xf32>
    %7 = arith.addf %3, %6 : vector<64x128xf32>
    %cst_7 = arith.constant 0.000000e+00 : f32
    %8 = vector.broadcast %cst_7 : f32 to vector<64x128xf32>
    %9 = arith.maximumf %7, %8 : vector<64x128xf32>
    %10 = arith.truncf %9 : vector<64x128xf32> to vector<64x128xbf16>
    %c1 = arith.constant 1 : index
    %c0_8 = arith.constant 0 : index
    %c0_9 = arith.constant 0 : index
    %11 = vector.load %arg2[%c1, %c0_8, %c0_9] : memref<10x128x128xbf16, #tpu.memory_space<vmem>>, vector<1x128x128xbf16>
    %12 = vector.shape_cast %11 : vector<1x128x128xbf16> to vector<128x128xbf16>
    %cst_10 = arith.constant dense<0.000000e+00> : vector<64x128xf32>
    %13 = tpu.matmul %10, %12, %cst_10 {dimension_numbers = #tpu.dot_dimension_numbers<[1], [0], [0], [1], [0, 0, 1, 1], [], []>} : vector<64x128xbf16>, vector<128x128xbf16>, vector<64x128xf32> -> vector<64x128xf32>
    %c1_11 = arith.constant 1 : index
    %c0_12 = arith.constant 0 : index
    %c0_13 = arith.constant 0 : index
    %14 = vector.load %arg3[%c1_11, %c0_12, %c0_13] : memref<10x1x128xf32, #tpu.memory_space<vmem>>, vector<1x1x128xf32>
    %15 = vector.shape_cast %14 : vector<1x1x128xf32> to vector<1x128xf32>
    %16 = vector.broadcast %15 : vector<1x128xf32> to vector<64x128xf32>
    %17 = arith.addf %13, %16 : vector<64x128xf32>
    %cst_14 = arith.constant 0.000000e+00 : f32
    %18 = vector.broadcast %cst_14 : f32 to vector<64x128xf32>
    %19 = arith.maximumf %17, %18 : vector<64x128xf32>
    %20 = arith.truncf %19 : vector<64x128xf32> to vector<64x128xbf16>
    %c2 = arith.constant 2 : index
    %c0_15 = arith.constant 0 : index
    %c0_16 = arith.constant 0 : index
    %21 = vector.load %arg2[%c2, %c0_15, %c0_16] : memref<10x128x128xbf16, #tpu.memory_space<vmem>>, vector<1x128x128xbf16>
    %22 = vector.shape_cast %21 : vector<1x128x128xbf16> to vector<128x128xbf16>
    %cst_17 = arith.constant dense<0.000000e+00> : vector<64x128xf32>
    %23 = tpu.matmul %20, %22, %cst_17 {dimension_numbers = #tpu.dot_dimension_numbers<[1], [0], [0], [1], [0, 0, 1, 1], [], []>} : vector<64x128xbf16>, vector<128x128xbf16>, vector<64x128xf32> -> vector<64x128xf32>
    %c2_18 = arith.constant 2 : index
    %c0_19 = arith.constant 0 : index
    %c0_20 = arith.constant 0 : index
    %24 = vector.load %arg3[%c2_18, %c0_19, %c0_20] : memref<10x1x128xf32, #tpu.memory_space<vmem>>, vector<1x1x128xf32>
    %25 = vector.shape_cast %24 : vector<1x1x128xf32> to vector<1x128xf32>
    %26 = vector.broadcast %25 : vector<1x128xf32> to vector<64x128xf32>
    %27 = arith.addf %23, %26 : vector<64x128xf32>
    %cst_21 = arith.constant 0.000000e+00 : f32
    %28 = vector.broadcast %cst_21 : f32 to vector<64x128xf32>
    %29 = arith.maximumf %27, %28 : vector<64x128xf32>
    %30 = arith.truncf %29 : vector<64x128xf32> to vector<64x128xbf16>
    %c3 = arith.constant 3 : index
    %c0_22 = arith.constant 0 : index
    %c0_23 = arith.constant 0 : index
    %31 = vector.load %arg2[%c3, %c0_22, %c0_23] : memref<10x128x128xbf16, #tpu.memory_space<vmem>>, vector<1x128x128xbf16>
    %32 = vector.shape_cast %31 : vector<1x128x128xbf16> to vector<128x128xbf16>
    %cst_24 = arith.constant dense<0.000000e+00> : vector<64x128xf32>
    %33 = tpu.matmul %30, %32, %cst_24 {dimension_numbers = #tpu.dot_dimension_numbers<[1], [0], [0], [1], [0, 0, 1, 1], [], []>} : vector<64x128xbf16>, vector<128x128xbf16>, vector<64x128xf32> -> vector<64x128xf32>
    %c3_25 = arith.constant 3 : index
    %c0_26 = arith.constant 0 : index
    %c0_27 = arith.constant 0 : index
    %34 = vector.load %arg3[%c3_25, %c0_26, %c0_27] : memref<10x1x128xf32, #tpu.memory_space<vmem>>, vector<1x1x128xf32>
    %35 = vector.shape_cast %34 : vector<1x1x128xf32> to vector<1x128xf32>
    %36 = vector.broadcast %35 : vector<1x128xf32> to vector<64x128xf32>
    %37 = arith.addf %33, %36 : vector<64x128xf32>
    %cst_28 = arith.constant 0.000000e+00 : f32
    %38 = vector.broadcast %cst_28 : f32 to vector<64x128xf32>
    %39 = arith.maximumf %37, %38 : vector<64x128xf32>
    %40 = arith.truncf %39 : vector<64x128xf32> to vector<64x128xbf16>
    %c4 = arith.constant 4 : index
    %c0_29 = arith.constant 0 : index
    %c0_30 = arith.constant 0 : index
    %41 = vector.load %arg2[%c4, %c0_29, %c0_30] : memref<10x128x128xbf16, #tpu.memory_space<vmem>>, vector<1x128x128xbf16>
    %42 = vector.shape_cast %41 : vector<1x128x128xbf16> to vector<128x128xbf16>
    %cst_31 = arith.constant dense<0.000000e+00> : vector<64x128xf32>
    %43 = tpu.matmul %40, %42, %cst_31 {dimension_numbers = #tpu.dot_dimension_numbers<[1], [0], [0], [1], [0, 0, 1, 1], [], []>} : vector<64x128xbf16>, vector<128x128xbf16>, vector<64x128xf32> -> vector<64x128xf32>
    %c4_32 = arith.constant 4 : index
    %c0_33 = arith.constant 0 : index
    %c0_34 = arith.constant 0 : index
    %44 = vector.load %arg3[%c4_32, %c0_33, %c0_34] : memref<10x1x128xf32, #tpu.memory_space<vmem>>, vector<1x1x128xf32>
    %45 = vector.shape_cast %44 : vector<1x1x128xf32> to vector<1x128xf32>
    %46 = vector.broadcast %45 : vector<1x128xf32> to vector<64x128xf32>
    %47 = arith.addf %43, %46 : vector<64x128xf32>
    %48 = tpu.iota {dimensions = array<i32: 1>} : vector<1x128xi32>
    %c16_i32 = arith.constant 16 : i32
    %49 = vector.broadcast %c16_i32 : i32 to vector<1x128xi32>
    %50 = arith.cmpi sge, %48, %49 : vector<1x128xi32>
    %c20_i32 = arith.constant 20 : i32
    %51 = vector.broadcast %c20_i32 : i32 to vector<1x128xi32>
    %52 = arith.cmpi slt, %48, %51 : vector<1x128xi32>
    %53 = arith.andi %50, %52 : vector<1x128xi1>
    %c20_i32_35 = arith.constant 20 : i32
    %54 = vector.broadcast %c20_i32_35 : i32 to vector<1x128xi32>
    %55 = arith.cmpi sge, %48, %54 : vector<1x128xi32>
    %c24_i32 = arith.constant 24 : i32
    %56 = vector.broadcast %c24_i32 : i32 to vector<1x128xi32>
    %57 = arith.cmpi slt, %48, %56 : vector<1x128xi32>
    %58 = arith.andi %55, %57 : vector<1x128xi1>
    %cst_36 = arith.constant 0.000000e+00 : f32
    %59 = vector.shape_cast %53 : vector<1x128xi1> to vector<1x128xi1>
    %60 = vector.broadcast %59 : vector<1x128xi1> to vector<64x128xi1>
    %61 = vector.broadcast %cst_36 : f32 to vector<64x128xf32>
    %62 = arith.select %60, %47, %61 : vector<64x128xi1>, vector<64x128xf32>
    %cst_37 = arith.constant 5.000000e-01 : f32
    %63 = vector.broadcast %cst_37 : f32 to vector<64x128xf32>
    %64 = arith.mulf %63, %62 : vector<64x128xf32>
    %65 = math.exp %64 : vector<64x128xf32>
    %66 = arith.extf %0 : vector<64x128xbf16> to vector<64x128xf32>
    %67 = arith.mulf %66, %65 : vector<64x128xf32>
    %cst_38 = arith.constant 0.000000e+00 : f32
    %68 = vector.shape_cast %58 : vector<1x128xi1> to vector<1x128xi1>
    %69 = vector.broadcast %68 : vector<1x128xi1> to vector<64x128xi1>
    %70 = vector.broadcast %cst_38 : f32 to vector<64x128xf32>
    %71 = arith.select %69, %47, %70 : vector<64x128xi1>, vector<64x128xf32>
    %72 = arith.addf %67, %71 : vector<64x128xf32>
    %73 = arith.truncf %72 : vector<64x128xf32> to vector<64x128xbf16>
    %c5 = arith.constant 5 : index
    %c0_39 = arith.constant 0 : index
    %c0_40 = arith.constant 0 : index
    %74 = vector.load %arg2[%c5, %c0_39, %c0_40] : memref<10x128x128xbf16, #tpu.memory_space<vmem>>, vector<1x128x128xbf16>
    %75 = vector.shape_cast %74 : vector<1x128x128xbf16> to vector<128x128xbf16>
    %cst_41 = arith.constant dense<0.000000e+00> : vector<64x128xf32>
    %76 = tpu.matmul %73, %75, %cst_41 {dimension_numbers = #tpu.dot_dimension_numbers<[1], [0], [0], [1], [0, 0, 1, 1], [], []>} : vector<64x128xbf16>, vector<128x128xbf16>, vector<64x128xf32> -> vector<64x128xf32>
    %c5_42 = arith.constant 5 : index
    %c0_43 = arith.constant 0 : index
    %c0_44 = arith.constant 0 : index
    %77 = vector.load %arg3[%c5_42, %c0_43, %c0_44] : memref<10x1x128xf32, #tpu.memory_space<vmem>>, vector<1x1x128xf32>
    %78 = vector.shape_cast %77 : vector<1x1x128xf32> to vector<1x128xf32>
    %79 = vector.broadcast %78 : vector<1x128xf32> to vector<64x128xf32>
    %80 = arith.addf %76, %79 : vector<64x128xf32>
    %cst_45 = arith.constant 0.000000e+00 : f32
    %81 = vector.broadcast %cst_45 : f32 to vector<64x128xf32>
    %82 = arith.maximumf %80, %81 : vector<64x128xf32>
    %83 = arith.truncf %82 : vector<64x128xf32> to vector<64x128xbf16>
    %c6 = arith.constant 6 : index
    %c0_46 = arith.constant 0 : index
    %c0_47 = arith.constant 0 : index
    %84 = vector.load %arg2[%c6, %c0_46, %c0_47] : memref<10x128x128xbf16, #tpu.memory_space<vmem>>, vector<1x128x128xbf16>
    %85 = vector.shape_cast %84 : vector<1x128x128xbf16> to vector<128x128xbf16>
    %cst_48 = arith.constant dense<0.000000e+00> : vector<64x128xf32>
    %86 = tpu.matmul %83, %85, %cst_48 {dimension_numbers = #tpu.dot_dimension_numbers<[1], [0], [0], [1], [0, 0, 1, 1], [], []>} : vector<64x128xbf16>, vector<128x128xbf16>, vector<64x128xf32> -> vector<64x128xf32>
    %c6_49 = arith.constant 6 : index
    %c0_50 = arith.constant 0 : index
    %c0_51 = arith.constant 0 : index
    %87 = vector.load %arg3[%c6_49, %c0_50, %c0_51] : memref<10x1x128xf32, #tpu.memory_space<vmem>>, vector<1x1x128xf32>
    %88 = vector.shape_cast %87 : vector<1x1x128xf32> to vector<1x128xf32>
    %89 = vector.broadcast %88 : vector<1x128xf32> to vector<64x128xf32>
    %90 = arith.addf %86, %89 : vector<64x128xf32>
    %cst_52 = arith.constant 0.000000e+00 : f32
    %91 = vector.broadcast %cst_52 : f32 to vector<64x128xf32>
    %92 = arith.maximumf %90, %91 : vector<64x128xf32>
    %93 = arith.truncf %92 : vector<64x128xf32> to vector<64x128xbf16>
    %c7 = arith.constant 7 : index
    %c0_53 = arith.constant 0 : index
    %c0_54 = arith.constant 0 : index
    %94 = vector.load %arg2[%c7, %c0_53, %c0_54] : memref<10x128x128xbf16, #tpu.memory_space<vmem>>, vector<1x128x128xbf16>
    %95 = vector.shape_cast %94 : vector<1x128x128xbf16> to vector<128x128xbf16>
    %cst_55 = arith.constant dense<0.000000e+00> : vector<64x128xf32>
    %96 = tpu.matmul %93, %95, %cst_55 {dimension_numbers = #tpu.dot_dimension_numbers<[1], [0], [0], [1], [0, 0, 1, 1], [], []>} : vector<64x128xbf16>, vector<128x128xbf16>, vector<64x128xf32> -> vector<64x128xf32>
    %c7_56 = arith.constant 7 : index
    %c0_57 = arith.constant 0 : index
    %c0_58 = arith.constant 0 : index
    %97 = vector.load %arg3[%c7_56, %c0_57, %c0_58] : memref<10x1x128xf32, #tpu.memory_space<vmem>>, vector<1x1x128xf32>
    %98 = vector.shape_cast %97 : vector<1x1x128xf32> to vector<1x128xf32>
    %99 = vector.broadcast %98 : vector<1x128xf32> to vector<64x128xf32>
    %100 = arith.addf %96, %99 : vector<64x128xf32>
    %cst_59 = arith.constant 0.000000e+00 : f32
    %101 = vector.broadcast %cst_59 : f32 to vector<64x128xf32>
    %102 = arith.maximumf %100, %101 : vector<64x128xf32>
    %103 = arith.truncf %102 : vector<64x128xf32> to vector<64x128xbf16>
    %c8 = arith.constant 8 : index
    %c0_60 = arith.constant 0 : index
    %c0_61 = arith.constant 0 : index
    %104 = vector.load %arg2[%c8, %c0_60, %c0_61] : memref<10x128x128xbf16, #tpu.memory_space<vmem>>, vector<1x128x128xbf16>
    %105 = vector.shape_cast %104 : vector<1x128x128xbf16> to vector<128x128xbf16>
    %cst_62 = arith.constant dense<0.000000e+00> : vector<64x128xf32>
    %106 = tpu.matmul %103, %105, %cst_62 {dimension_numbers = #tpu.dot_dimension_numbers<[1], [0], [0], [1], [0, 0, 1, 1], [], []>} : vector<64x128xbf16>, vector<128x128xbf16>, vector<64x128xf32> -> vector<64x128xf32>
    %c8_63 = arith.constant 8 : index
    %c0_64 = arith.constant 0 : index
    %c0_65 = arith.constant 0 : index
    %107 = vector.load %arg3[%c8_63, %c0_64, %c0_65] : memref<10x1x128xf32, #tpu.memory_space<vmem>>, vector<1x1x128xf32>
    %108 = vector.shape_cast %107 : vector<1x1x128xf32> to vector<1x128xf32>
    %109 = vector.broadcast %108 : vector<1x128xf32> to vector<64x128xf32>
    %110 = arith.addf %106, %109 : vector<64x128xf32>
    %cst_66 = arith.constant 0.000000e+00 : f32
    %111 = vector.broadcast %cst_66 : f32 to vector<64x128xf32>
    %112 = arith.maximumf %110, %111 : vector<64x128xf32>
    %113 = arith.truncf %112 : vector<64x128xf32> to vector<64x128xbf16>
    %c9 = arith.constant 9 : index
    %c0_67 = arith.constant 0 : index
    %c0_68 = arith.constant 0 : index
    %114 = vector.load %arg2[%c9, %c0_67, %c0_68] : memref<10x128x128xbf16, #tpu.memory_space<vmem>>, vector<1x128x128xbf16>
    %115 = vector.shape_cast %114 : vector<1x128x128xbf16> to vector<128x128xbf16>
    %cst_69 = arith.constant dense<0.000000e+00> : vector<64x128xf32>
    %116 = tpu.matmul %113, %115, %cst_69 {dimension_numbers = #tpu.dot_dimension_numbers<[1], [0], [0], [1], [0, 0, 1, 1], [], []>} : vector<64x128xbf16>, vector<128x128xbf16>, vector<64x128xf32> -> vector<64x128xf32>
    %c9_70 = arith.constant 9 : index
    %c0_71 = arith.constant 0 : index
    %c0_72 = arith.constant 0 : index
    %117 = vector.load %arg3[%c9_70, %c0_71, %c0_72] : memref<10x1x128xf32, #tpu.memory_space<vmem>>, vector<1x1x128xf32>
    %118 = vector.shape_cast %117 : vector<1x1x128xf32> to vector<1x128xf32>
    %119 = vector.broadcast %118 : vector<1x128xf32> to vector<64x128xf32>
    %120 = arith.addf %116, %119 : vector<64x128xf32>
    %121 = arith.addf %120, %47 : vector<64x128xf32>
    %c0_73 = arith.constant 0 : index
    %c0_74 = arith.constant 0 : index
    %122 = vector.load %arg4[%c0_73, %c0_74] : memref<64x128xf32, #tpu.memory_space<vmem>>, vector<64x128xf32>
    tpu.vector_store %arg4[%c0_73, %c0_74], %121 {strides = array<i32>} : memref<64x128xf32, #tpu.memory_space<vmem>>, vector<64x128xf32>,
    return
  }
  func.func @transform_0(%arg0: i32) -> (i32, i32) {
    %c0_i32 = arith.constant 0 : i32
    %c0_i32_0 = arith.constant 0 : i32
    return %arg0, %c0_i32 : i32, i32
  }
  func.func @transform_1(%arg0: i32) -> (i32, i32, i32) {
    %c0_i32 = arith.constant 0 : i32
    %c0_i32_0 = arith.constant 0 : i32
    %c0_i32_1 = arith.constant 0 : i32
    %c0_i32_2 = arith.constant 0 : i32
    return %c0_i32, %c0_i32_0, %c0_i32_1 : i32, i32, i32
  }
  func.func @transform_2(%arg0: i32) -> (i32, i32, i32) {
    %c0_i32 = arith.constant 0 : i32
    %c0_i32_0 = arith.constant 0 : i32
    %c0_i32_1 = arith.constant 0 : i32
    %c0_i32_2 = arith.constant 0 : i32
    return %c0_i32, %c0_i32_0, %c0_i32_1 : i32, i32, i32
  }
  func.func @transform_3(%arg0: i32) -> (i32, i32) {
    %c0_i32 = arith.constant 0 : i32
    %c0_i32_0 = arith.constant 0 : i32
    return %arg0, %c0_i32 : i32, i32
  }
}

</mosaic_0001>

<llo_original>
// kernel: tpu_custom_call.1
$region0: #{tpu_custom_call.1}
  #allocation0 [shape = 'u32[]', space=smem, size = 0x4, offset = 0x4, fixed_abs, tag = 'smem constant byte address 0x4 - core index']
  #allocation1 [shape = 'u32[144,128]{1,0:T(1,128)}', space=vmem, size = 0x12000, scoped, tag = 'internal scratch']
  %s0 = inlined_call_operand.hbm [shape: bf16[128,128], index: 0, kind: input, shape index: {}]
  %s1 = inlined_call_operand.hbm [shape: bf16[10,128,128], index: 1, kind: input, shape index: {}]
  %s2 = inlined_call_operand.hbm [shape: f32[10,1,128], index: 2, kind: input, shape index: {}]
  %s3 = inlined_call_operand.hbm [shape: f32[128,128], index: 3, kind: output, shape index: {}]
  %s4 = sld [smem:[#allocation0]]
  $region57: #{tpu_custom_call.1} parent=0
    _
  %s6 = ssub.s32 1, %s4
  %s7 = scalar_select 0, %s6, %s4
  $region1: #{tpu_custom_call.1} parent=0
    #allocation2 [shape = 'u8[32768]{0}', space=vmem, size = 0x8000, scoped, tag = 'input window, operand 0']
    #allocation3 [shape = 's32[2]{0}', space=sflag, size = 0x8, scoped, tag = 'scoped memory for tpu_custom_call.1']
    #allocation4 [shape = 's32[2]{0}', space=sflag, size = 0x8, scoped, tag = 'scoped memory for tpu_custom_call.1']
    #allocation5 [shape = 'u8[327680]{0}', space=vmem, size = 0x50000, scoped, tag = 'input window, operand 1, single buffered']
    #allocation6 [shape = 's32[1]{0}', space=sflag, size = 0x4, scoped, tag = 'scoped memory for tpu_custom_call.1']
    #allocation7 [shape = 'u8[5120]{0}', space=vmem, size = 0x1400, scoped, tag = 'input window, operand 2, single buffered']
    #allocation8 [shape = 'u8[65536]{0}', space=vmem, size = 0x10000, scoped, tag = 'output window, operand 0']
    %8 = vsyncpa [#allocation3], 0
    %s9 = scalar_lea.sflag [#allocation3], 1
    %10 = vsyncpa %s9, 0
    %11 = vsyncpa [#allocation6], 0
    %12 = vsyncpa [#allocation4], 0
    %s13 = scalar_lea.sflag [#allocation4], 1
    %14 = vsyncpa %s13, 0
    loop: start=0, step=1, limit=4
    $region2: #{tpu_custom_call.1} parent=1 // loop_pre_header
      _
    $region3: #{tpu_custom_call.1} parent=1 // loop_header
      %s16 = sphi 0, %s20
      %p17 = scmp.ge.s32.totalorder %s16, 4
      %s26 = sphi 0, %s28
      %s29 = sphi 0, %s26
      %s30 = sphi 0, %s29
      %s46 = sphi 0, %s30
      %s50 = sphi 0, %s50
      %s52 = sphi 0, %s50
      %s53 = sphi 0, %s52
      %s67 = sphi 0, %s53
      %s71 = sphi 0, %s71
      %s73 = sphi 0, %s71
      %s74 = sphi 0, %s73
      %s88 = sphi 0, %s74
      %s94 = sphi 0, %s96
      %s97 = sphi 0, %s94
      %s98 = sphi 0, %s97
      %s114 = sphi 0, %s98
    $region4: #{tpu_custom_call.1} parent=1 // loop_header_branch
      %19 = sbr.rel (%p17) target = $region8
    $region5: #{tpu_custom_call.1} parent=1 // loop_body
      %s21 = ssub.s32 %s16, 1
      %s22 = ssub.s32 %s16, 2
      %s23 = sadd.s32 %s16, 1
      %s24 = ssub.s32 %s16, %s23
      %p25 = scmp.eq.s32.totalorder %s24, 0
      %s27 = sadd.s32 %s26, 1
      %s28 = scalar_select %p25, %s26, %s27
      %p31 = pneg %p25
      %p32 = scmp.eq.s32.totalorder %s16, 1
      %p33 = por %p31, %p32
      %p34 = scmp.ne.s32.totalorder %s26, %s29
      %p35 = scmp.eq.s32.totalorder %s16, 0
      %p36 = por %p34, %p35
      %p37 = scmp.ne.s32.totalorder %s26, %s29
      %p38 = scmp.eq.s32.totalorder %s21, 1
      %p39 = por %p37, %p38
      %p40 = scmp.ne.s32.totalorder %s29, %s30
      %p41 = scmp.eq.s32.totalorder %s21, 0
      %p42 = por %p40, %p41
      %p43 = scmp.ne.s32.totalorder %s29, %s30
      %p44 = scmp.eq.s32.totalorder %s22, 1
      %p45 = por %p43, %p44
      %p47 = scmp.ne.s32.totalorder %s30, %s46
      %p48 = scmp.eq.s32.totalorder %s22, 0
      %p49 = por %p47, %p48
      %s51 = sadd.s32 %s50, 1
      %p54 = scmp.eq.s32.totalorder %s16, 1
      %p55 = scmp.ne.s32.totalorder %s50, %s52
      %p56 = scmp.eq.s32.totalorder %s16, 0
      %p57 = por %p55, %p56
      %p58 = scmp.ne.s32.totalorder %s50, %s52
      %p59 = scmp.eq.s32.totalorder %s21, 1
      %p60 = por %p58, %p59
      %p61 = scmp.ne.s32.totalorder %s52, %s53
      %p62 = scmp.eq.s32.totalorder %s21, 0
      %p63 = por %p61, %p62
      %p64 = scmp.ne.s32.totalorder %s52, %s53
      %p65 = scmp.eq.s32.totalorder %s22, 1
      %p66 = por %p64, %p65
      %p68 = scmp.ne.s32.totalorder %s53, %s67
      %p69 = scmp.eq.s32.totalorder %s22, 0
      %p70 = por %p68, %p69
      %s72 = sadd.s32 %s71, 1
      %p75 = scmp.eq.s32.totalorder %s16, 1
      %p76 = scmp.ne.s32.totalorder %s71, %s73
      %p77 = scmp.eq.s32.totalorder %s16, 0
      %p78 = por %p76, %p77
      %p79 = scmp.ne.s32.totalorder %s71, %s73
      %p80 = scmp.eq.s32.totalorder %s21, 1
      %p81 = por %p79, %p80
      %p82 = scmp.ne.s32.totalorder %s73, %s74
      %p83 = scmp.eq.s32.totalorder %s21, 0
      %p84 = por %p82, %p83
      %p85 = scmp.ne.s32.totalorder %s73, %s74
      %p86 = scmp.eq.s32.totalorder %s22, 1
      %p87 = por %p85, %p86
      %p89 = scmp.ne.s32.totalorder %s74, %s88
      %p90 = scmp.eq.s32.totalorder %s22, 0
      %p91 = por %p89, %p90
      %s92 = ssub.s32 %s16, %s23
      %p93 = scmp.eq.s32.totalorder %s92, 0
      %s95 = sadd.s32 %s94, 1
      %s96 = scalar_select %p93, %s94, %s95
      %p99 = pneg %p93
      %p100 = scmp.eq.s32.totalorder %s16, 1
      %p101 = por %p99, %p100
      %p102 = scmp.ne.s32.totalorder %s94, %s97
      %p103 = scmp.eq.s32.totalorder %s16, 0
      %p104 = por %p102, %p103
      %p105 = scmp.ne.s32.totalorder %s94, %s97
      %p106 = scmp.eq.s32.totalorder %s21, 1
      %p107 = por %p105, %p106
      %p108 = scmp.ne.s32.totalorder %s97, %s98
      %p109 = scmp.eq.s32.totalorder %s21, 0
      %p110 = por %p108, %p109
      %p111 = scmp.ne.s32.totalorder %s97, %s98
      %p112 = scmp.eq.s32.totalorder %s22, 1
      %p113 = por %p111, %p112
      %p115 = scmp.ne.s32.totalorder %s98, %s114
      %p116 = scmp.eq.s32.totalorder %s22, 0
      %p117 = por %p115, %p116
      %p118 = scmp.le.s32.totalorder 1, %s16
      %p119 = scmp.lt.s32.totalorder %s16, 3
      %p120 = pnand %p118, %p119
      %p121 = pneg %p120
      // Predicated region
      $region9: #{tpu_custom_call.1} parent=5 // pred_check
        _
      $region10: #{tpu_custom_call.1} parent=5 // pred_check_branch
        %123 = sbr.rel (%p120) target = $region12
      $region11: #{tpu_custom_call.1} parent=5 // pred_region
        %s124 = ssub.s32 %s16, 1
        // Predicated region
        $region13: #{tpu_custom_call.1} parent=11 // pred_check
          %p125 = pneg %p63
        $region14: #{tpu_custom_call.1} parent=11 // pred_check_branch
          %127 = sbr.rel (%p125) target = $region16
        $region15: #{tpu_custom_call.1} parent=11 // pred_region
          %s129 = ssub.s32 10240, 10240
          %130 = vsyncadd [#allocation6], %s129
          %s131 = sshll.u32 [#allocation5], 4
          %s132 = int_to_ptr.vmem [resolvable:$true] %s131
          %137 = dma.hbm_to_vmem [thread:$0]  %s1, 10240, %s132, [#allocation6], 64, 64, 4
        $region16: #{tpu_custom_call.1} parent=11 // pred_fallthru
          _
        // Predicated region
        $region17: #{tpu_custom_call.1} parent=11 // pred_check
          %p138 = pneg %p84
        $region18: #{tpu_custom_call.1} parent=11 // pred_check_branch
          %140 = sbr.rel (%p138) target = $region20
        $region19: #{tpu_custom_call.1} parent=11 // pred_region
          %s142 = ssub.s32 160, 160
          %143 = vsyncadd [#allocation6], %s142
          %s144 = sshll.u32 [#allocation7], 4
          %s145 = int_to_ptr.vmem [resolvable:$true] %s144
          %150 = dma.hbm_to_vmem [thread:$0]  %s2, 160, %s145, [#allocation6], 16, 16, 1
        $region20: #{tpu_custom_call.1} parent=11 // pred_fallthru
          _
      $region12: #{tpu_custom_call.1} parent=5 // pred_fallthru
        _
      %p151 = scmp.lt.s32.totalorder %s16, 2
      // Predicated region
      $region21: #{tpu_custom_call.1} parent=5 // pred_check
        %p152 = pneg %p151
      $region22: #{tpu_custom_call.1} parent=5 // pred_check_branch
        %154 = sbr.rel (%p152) target = $region24
      $region23: #{tpu_custom_call.1} parent=5 // pred_region
        // Predicated region
        $region25: #{tpu_custom_call.1} parent=23 // pred_check
          %p155 = pneg %p36
        $region26: #{tpu_custom_call.1} parent=23 // pred_check_branch
          %157 = sbr.rel (%p155) target = $region28
        $region27: #{tpu_custom_call.1} parent=23 // pred_region
          %s158 = sand.u32 %s26, 1
          %s159 = scalar_lea.sflag [#allocation3], %s158
          %s160 = sand.u32 %s26, 1
          %s161 = smul.addr %s160, 32
          %s162 = scalar_lea.vmem [#allocation2], %s161
          %s163 = smul.u32 8, %s16
          %s165 = ssub.s32 512, 512
          %166 = vsyncadd %s159, %s165
          %s167 = smul.addr %s163, 64
          %s168 = scalar_lea.hbm %s0, %s167
          %s169 = sshll.u32 %s162, 4
          %s170 = int_to_ptr.vmem [resolvable:$true] %s169
          %175 = dma.hbm_to_vmem [thread:$0]  %s168, 512, %s170, %s159, 64, 64, 4
        $region28: #{tpu_custom_call.1} parent=23 // pred_fallthru
          _
      $region24: #{tpu_custom_call.1} parent=5 // pred_fallthru
        _
      %p176 = scmp.le.s32.totalorder 1, %s16
      %p177 = scmp.lt.s32.totalorder %s16, 3
      %p178 = pnand %p176, %p177
      %p179 = pneg %p178
      // Predicated region
      $region29: #{tpu_custom_call.1} parent=5 // pred_check
        _
      $region30: #{tpu_custom_call.1} parent=5 // pred_check_branch
        %181 = sbr.rel (%p178) target = $region32
      $region31: #{tpu_custom_call.1} parent=5 // pred_region
        %s182 = ssub.s32 %s16, 1
        %s183 = sand.u32 %s29, 1
        %s184 = scalar_lea.sflag [#allocation3], %s183
        %s185 = sand.u32 %s29, 1
        %s186 = smul.addr %s185, 32
        %s187 = scalar_lea.vmem [#allocation2], %s186
        // Predicated region
        $region33: #{tpu_custom_call.1} parent=31 // pred_check
          %p188 = pneg %p42
        $region34: #{tpu_custom_call.1} parent=31 // pred_check_branch
          %190 = sbr.rel (%p188) target = $region36
        $region35: #{tpu_custom_call.1} parent=31 // pred_region
          %191 = dma.done %s184, 512
        $region36: #{tpu_custom_call.1} parent=31 // pred_fallthru
          _
        // Predicated region
        $region37: #{tpu_custom_call.1} parent=31 // pred_check
          %p192 = pneg %p63
        $region38: #{tpu_custom_call.1} parent=31 // pred_check_branch
          %194 = sbr.rel (%p192) target = $region40
        $region39: #{tpu_custom_call.1} parent=31 // pred_region
          %195 = dma.done [#allocation6], 10240
        $region40: #{tpu_custom_call.1} parent=31 // pred_fallthru
          _
        // Predicated region
        $region41: #{tpu_custom_call.1} parent=31 // pred_check
          %p196 = pneg %p84
        $region42: #{tpu_custom_call.1} parent=31 // pred_check_branch
          %198 = sbr.rel (%p196) target = $region44
        $region43: #{tpu_custom_call.1} parent=31 // pred_region
          %199 = dma.done [#allocation6], 160
        $region44: #{tpu_custom_call.1} parent=31 // pred_fallthru
          _
        %s200 = sand.u32 %s29, 1
        %s201 = scalar_lea.sflag [#allocation3], %s200
        %s202 = sand.u32 %s29, 1
        %s203 = smul.addr %s202, 32
        %s204 = scalar_lea.vmem [#allocation2], %s203
        %p205 = pneg %p42
        %p206 = pneg %p39
        %p207 = pneg %p63
        %p208 = pneg %p60
        %p209 = pneg %p84
        %p210 = pneg %p81
        %p211 = pneg %p110
        %p212 = pneg %p107
        %s213 = sand.u32 %s97, 1
        %s214 = scalar_lea.sflag [#allocation4], %s213
        %s215 = sand.u32 %s97, 1
        %s216 = smul.addr %s215, 64
        %s217 = scalar_lea.vmem [#allocation8], %s216
        %s218 = smul.u32 8, %s21
        %s219 = smul.u32 8, %s21
        %v221 = vld [vmem:[%s187] sm:$0xf]
        %v222 = vld [vmem:[%s187 + $0x4] sm:$0xf]
        %v223 = vld [vmem:[%s187 + $0x8] sm:$0xf]
        %v224 = vld [vmem:[%s187 + $0xc] sm:$0xf]
        %v225 = vld [vmem:[%s187 + $0x10] sm:$0xf]
        %v226 = vld [vmem:[%s187 + $0x14] sm:$0xf]
        %v227 = vld [vmem:[%s187 + $0x18] sm:$0xf]
        %v228 = vld [vmem:[%s187 + $0x1c] sm:$0xf]
        %v229 = vld [vmem:[#allocation5] sm:$0xf]
        %v230 = vld [vmem:[#allocation5 + $0x4] sm:$0xf]
        %v231 = vld [vmem:[#allocation5 + $0x8] sm:$0xf]
        %v232 = vld [vmem:[#allocation5 + $0xc] sm:$0xf]
        %v233 = vld [vmem:[#allocation5 + $0x10] sm:$0xf]
        %v234 = vld [vmem:[#allocation5 + $0x14] sm:$0xf]
        %v235 = vld [vmem:[#allocation5 + $0x18] sm:$0xf]
        %v236 = vld [vmem:[#allocation5 + $0x1c] sm:$0xf]
        %v237 = vld [vmem:[#allocation5 + $0x20] sm:$0xf]
        %v238 = vld [vmem:[#allocation5 + $0x24] sm:$0xf]
        %v239 = vld [vmem:[#allocation5 + $0x28] sm:$0xf]
        %v240 = vld [vmem:[#allocation5 + $0x2c] sm:$0xf]
        %v241 = vld [vmem:[#allocation5 + $0x30] sm:$0xf]
        %v242 = vld [vmem:[#allocation5 + $0x34] sm:$0xf]
        %v243 = vld [vmem:[#allocation5 + $0x38] sm:$0xf]
        %v244 = vld [vmem:[#allocation5 + $0x3c] sm:$0xf]
        %v245 = vld [vmem:[#allocation7] sm:$0x1]
        %v247 = vlaneseq
        %v248 = vshrl.u32 %v247, 7
        %v249 = vsub.s32 0, %v248
        %v250 = vrot.slane %v245, %v249
        %v260 = vunpack.c.l.b16 %v221
        %v261 = vunpack.c.l.b16 %v222
        %v262 = vunpack.c.l.b16 %v223
        %v263 = vunpack.c.l.b16 %v224
        %v264 = vunpack.c.l.b16 %v225
        %v265 = vunpack.c.l.b16 %v226
        %v266 = vunpack.c.l.b16 %v227
        %v267 = vunpack.c.l.b16 %v228
        %v268 = vpack.c.b16 %v261, %v260
        %v269 = vpack.c.b16 %v263, %v262
        %v270 = vpack.c.b16 %v265, %v264
        %v271 = vpack.c.b16 %v267, %v266
        %v292 = vunpack.c.l.b16 %v229
        %v293 = vunpack.c.l.b16 %v230
        %v294 = vunpack.c.l.b16 %v231
        %v295 = vunpack.c.l.b16 %v232
        %v296 = vunpack.c.l.b16 %v233
        %v297 = vunpack.c.l.b16 %v234
        %v298 = vunpack.c.l.b16 %v235
        %v299 = vunpack.c.l.b16 %v236
        %v300 = vunpack.c.l.b16 %v237
        %v301 = vunpack.c.l.b16 %v238
        %v302 = vunpack.c.l.b16 %v239
        %v303 = vunpack.c.l.b16 %v240
        %v304 = vunpack.c.l.b16 %v241
        %v305 = vunpack.c.l.b16 %v242
        %v306 = vunpack.c.l.b16 %v243
        %v307 = vunpack.c.l.b16 %v244
        %v308 = vpack.c.b16 %v293, %v292
        %v309 = vpack.c.b16 %v295, %v294
        %v310 = vpack.c.b16 %v297, %v296
        %v311 = vpack.c.b16 %v299, %v298
        %v312 = vpack.c.b16 %v301, %v300
        %v313 = vpack.c.b16 %v303, %v302
        %v314 = vpack.c.b16 %v305, %v304
        %v315 = vpack.c.b16 %v307, %v306
        %324 = vmatprep.subr.bf16.mxu0 0
        %325 = vmatpush1.bf16.msra.mxu0 %v308
        %326 = vmatprep.subr.bf16.mxu0 0
        %327 = vmatpush1.bf16.msra.mxu0 %v309
        %328 = vmatprep.subr.bf16.mxu0 0
        %329 = vmatpush1.bf16.msra.mxu0 %v310
        %330 = vmatprep.subr.bf16.mxu0 0
        %331 = vmatpush1.bf16.msra.mxu0 %v311
        %332 = vmatprep.subr.bf16.mxu0 0
        %333 = vmatpush1.bf16.msra.mxu0 %v312
        %334 = vmatprep.subr.bf16.mxu0 0
        %335 = vmatpush1.bf16.msra.mxu0 %v313
        %336 = vmatprep.subr.bf16.mxu0 0
        %337 = vmatpush1.bf16.msra.mxu0 %v314
        %338 = vmatprep.subr.bf16.mxu0 0
        %339 = vmatpush1.bf16.msra.mxu0 %v315
        %340 = vmatprep.subr.bf16.mxu0 0
        %341 = vmatpush1.bf16.msra.mxu0 0
        %342 = vmatprep.subr.bf16.mxu0 0
        %343 = vmatpush1.bf16.msra.mxu0 0
        %344 = vmatprep.subr.bf16.mxu0 0
        %345 = vmatpush1.bf16.msra.mxu0 0
        %346 = vmatprep.subr.bf16.mxu0 0
        %347 = vmatpush1.bf16.msra.mxu0 0
        %348 = vmatprep.subr.bf16.mxu0 0
        %349 = vmatpush1.bf16.msra.mxu0 0
        %350 = vmatprep.subr.bf16.mxu0 0
        %351 = vmatpush1.bf16.msra.mxu0 0
        %352 = vmatprep.subr.bf16.mxu0 0
        %353 = vmatpush1.bf16.msra.mxu0 0
        %354 = vmatprep.subr.bf16.mxu0 0
        %355 = vmatpush1.bf16.msra.mxu0 0
        %356 = vmatprep.mubr.bf16.mxu0 0
        %357 = vmatmul.mubr.bf16.gmra.mrb[0].mxu0 %v268
        %v358 = vpop.f32.mrb[0].mxu0
        %v359 = vadd.f32 %v250, %v358
        %v360 = vpop.f32.mrb[0].mxu0
        %v361 = vpop.f32.mrb[0].mxu0
        %v362 = vadd.f32 %v250, %v361
        %v363 = vpop.f32.mrb[0].mxu0
        %364 = vmatprep.mubr.bf16.mxu0 0
        %365 = vmatmul.mubr.bf16.gmra.mrb[0].mxu0 %v269
        %v366 = vpop.f32.mrb[0].mxu0
        %v367 = vadd.f32 %v250, %v366
        %v368 = vpop.f32.mrb[0].mxu0
        %v369 = vpop.f32.mrb[0].mxu0
        %v370 = vadd.f32 %v250, %v369
        %v371 = vpop.f32.mrb[0].mxu0
        %372 = vmatprep.mubr.bf16.mxu0 0
        %373 = vmatmul.mubr.bf16.gmra.mrb[0].mxu0 %v270
        %v374 = vpop.f32.mrb[0].mxu0
        %v375 = vadd.f32 %v250, %v374
        %v376 = vpop.f32.mrb[0].mxu0
        %v377 = vpop.f32.mrb[0].mxu0
        %v378 = vadd.f32 %v250, %v377
        %v379 = vpop.f32.mrb[0].mxu0
        %380 = vmatprep.mubr.bf16.mxu0 0
        %381 = vmatmul.mubr.bf16.gmra.mrb[0].mxu0 %v271
        %v382 = vpop.f32.mrb[0].mxu0
        %v383 = vadd.f32 %v250, %v382
        %v384 = vpop.f32.mrb[0].mxu0
        %v385 = vpop.f32.mrb[0].mxu0
        %v386 = vadd.f32 %v250, %v385
        %v387 = vpop.f32.mrb[0].mxu0
        %388 = vdwg.mxu0
        %v389 = vmax.f32 %v359, 0.0
        %v390 = vmax.f32 %v362, 0.0
        %v391 = vmax.f32 %v367, 0.0
        %v392 = vmax.f32 %v370, 0.0
        %v393 = vmax.f32 %v375, 0.0
        %v394 = vmax.f32 %v378, 0.0
        %v395 = vmax.f32 %v383, 0.0
        %v396 = vmax.f32 %v386, 0.0
        %v397 = vpack.c.bf16 %v390, %v389
        %v398 = vpack.c.bf16 %v392, %v391
        %v399 = vpack.c.bf16 %v394, %v393
        %v400 = vpack.c.bf16 %v396, %v395
        %s401 = scalar_lea.vmem [#allocation5], 64
        %v402 = vld [vmem:[%s401] sm:$0xf]
        %v403 = vld [vmem:[%s401 + $0x4] sm:$0xf]
        %v404 = vld [vmem:[%s401 + $0x8] sm:$0xf]
        %v405 = vld [vmem:[%s401 + $0xc] sm:$0xf]
        %v406 = vld [vmem:[%s401 + $0x10] sm:$0xf]
        %v407 = vld [vmem:[%s401 + $0x14] sm:$0xf]
        %v408 = vld [vmem:[%s401 + $0x18] sm:$0xf]
        %v409 = vld [vmem:[%s401 + $0x1c] sm:$0xf]
        %v410 = vld [vmem:[%s401 + $0x20] sm:$0xf]
        %v411 = vld [vmem:[%s401 + $0x24] sm:$0xf]
        %v412 = vld [vmem:[%s401 + $0x28] sm:$0xf]
        %v413 = vld [vmem:[%s401 + $0x2c] sm:$0xf]
        %v414 = vld [vmem:[%s401 + $0x30] sm:$0xf]
        %v415 = vld [vmem:[%s401 + $0x34] sm:$0xf]
        %v416 = vld [vmem:[%s401 + $0x38] sm:$0xf]
        %v417 = vld [vmem:[%s401 + $0x3c] sm:$0xf]
        %s418 = scalar_lea.vmem [#allocation7], 1
        %v419 = vld [vmem:[%s418] sm:$0x1]
        %v421 = vlaneseq
        %v422 = vshrl.u32 %v421, 7
        %v423 = vsub.s32 0, %v422
        %v424 = vrot.slane %v419, %v423
        %v442 = vunpack.c.l.b16 %v402
        %v443 = vunpack.c.l.b16 %v403
        %v444 = vunpack.c.l.b16 %v404
        %v445 = vunpack.c.l.b16 %v405
        %v446 = vunpack.c.l.b16 %v406
        %v447 = vunpack.c.l.b16 %v407
        %v448 = vunpack.c.l.b16 %v408
        %v449 = vunpack.c.l.b16 %v409
        %v450 = vunpack.c.l.b16 %v410
        %v451 = vunpack.c.l.b16 %v411
        %v452 = vunpack.c.l.b16 %v412
        %v453 = vunpack.c.l.b16 %v413
        %v454 = vunpack.c.l.b16 %v414
        %v455 = vunpack.c.l.b16 %v415
        %v456 = vunpack.c.l.b16 %v416
        %v457 = vunpack.c.l.b16 %v417
        %v458 = vpack.c.b16 %v443, %v442
        %v459 = vpack.c.b16 %v445, %v444
        %v460 = vpack.c.b16 %v447, %v446
        %v461 = vpack.c.b16 %v449, %v448
        %v462 = vpack.c.b16 %v451, %v450
        %v463 = vpack.c.b16 %v453, %v452
        %v464 = vpack.c.b16 %v455, %v454
        %v465 = vpack.c.b16 %v457, %v456
        %474 = vmatprep.subr.bf16.mxu0 0
        %475 = vmatpush1.bf16.msra.mxu0 %v458
        %476 = vmatprep.subr.bf16.mxu0 0
        %477 = vmatpush1.bf16.msra.mxu0 %v459
        %478 = vmatprep.subr.bf16.mxu0 0
        %479 = vmatpush1.bf16.msra.mxu0 %v460
        %480 = vmatprep.subr.bf16.mxu0 0
        %481 = vmatpush1.bf16.msra.mxu0 %v461
        %482 = vmatprep.subr.bf16.mxu0 0
        %483 = vmatpush1.bf16.msra.mxu0 %v462
        %484 = vmatprep.subr.bf16.mxu0 0
        %485 = vmatpush1.bf16.msra.mxu0 %v463
        %486 = vmatprep.subr.bf16.mxu0 0
        %487 = vmatpush1.bf16.msra.mxu0 %v464
        %488 = vmatprep.subr.bf16.mxu0 0
        %489 = vmatpush1.bf16.msra.mxu0 %v465
        %490 = vmatprep.subr.bf16.mxu0 0
        %491 = vmatpush1.bf16.msra.mxu0 0
        %492 = vmatprep.subr.bf16.mxu0 0
        %493 = vmatpush1.bf16.msra.mxu0 0
        %494 = vmatprep.subr.bf16.mxu0 0
        %495 = vmatpush1.bf16.msra.mxu0 0
        %496 = vmatprep.subr.bf16.mxu0 0
        %497 = vmatpush1.bf16.msra.mxu0 0
        %498 = vmatprep.subr.bf16.mxu0 0
        %499 = vmatpush1.bf16.msra.mxu0 0
        %500 = vmatprep.subr.bf16.mxu0 0
        %501 = vmatpush1.bf16.msra.mxu0 0
        %502 = vmatprep.subr.bf16.mxu0 0
        %503 = vmatpush1.bf16.msra.mxu0 0
        %504 = vmatprep.subr.bf16.mxu0 0
        %505 = vmatpush1.bf16.msra.mxu0 0
        %506 = vmatprep.mubr.bf16.mxu0 0
        %507 = vmatmul.mubr.bf16.gmra.mrb[0].mxu0 %v397
        %v508 = vpop.f32.mrb[0].mxu0
        %v509 = vadd.f32 %v424, %v508
        %v510 = vpop.f32.mrb[0].mxu0
        %v511 = vpop.f32.mrb[0].mxu0
        %v512 = vadd.f32 %v424, %v511
        %v513 = vpop.f32.mrb[0].mxu0
        %514 = vmatprep.mubr.bf16.mxu0 0
        %515 = vmatmul.mubr.bf16.gmra.mrb[0].mxu0 %v398
        %v516 = vpop.f32.mrb[0].mxu0
        %v517 = vadd.f32 %v424, %v516
        %v518 = vpop.f32.mrb[0].mxu0
        %v519 = vpop.f32.mrb[0].mxu0
        %v520 = vadd.f32 %v424, %v519
        %v521 = vpop.f32.mrb[0].mxu0
        %522 = vmatprep.mubr.bf16.mxu0 0
        %523 = vmatmul.mubr.bf16.gmra.mrb[0].mxu0 %v399
        %v524 = vpop.f32.mrb[0].mxu0
        %v525 = vadd.f32 %v424, %v524
        %v526 = vpop.f32.mrb[0].mxu0
        %v527 = vpop.f32.mrb[0].mxu0
        %v528 = vadd.f32 %v424, %v527
        %v529 = vpop.f32.mrb[0].mxu0
        %530 = vmatprep.mubr.bf16.mxu0 0
        %531 = vmatmul.mubr.bf16.gmra.mrb[0].mxu0 %v400
        %v532 = vpop.f32.mrb[0].mxu0
        %v533 = vadd.f32 %v424, %v532
        %v534 = vpop.f32.mrb[0].mxu0
        %v535 = vpop.f32.mrb[0].mxu0
        %v536 = vadd.f32 %v424, %v535
        %v537 = vpop.f32.mrb[0].mxu0
        %538 = vdwg.mxu0
        %v539 = vmax.f32 %v509, 0.0
        %v540 = vmax.f32 %v512, 0.0
        %v541 = vmax.f32 %v517, 0.0
        %v542 = vmax.f32 %v520, 0.0
        %v543 = vmax.f32 %v525, 0.0
        %v544 = vmax.f32 %v528, 0.0
        %v545 = vmax.f32 %v533, 0.0
        %v546 = vmax.f32 %v536, 0.0
        %v547 = vpack.c.bf16 %v540, %v539
        %v548 = vpack.c.bf16 %v542, %v541
        %v549 = vpack.c.bf16 %v544, %v543
        %v550 = vpack.c.bf16 %v546, %v545
        %s551 = scalar_lea.vmem [#allocation5], 128
        %v552 = vld [vmem:[%s551] sm:$0xf]
        %v553 = vld [vmem:[%s551 + $0x4] sm:$0xf]
        %v554 = vld [vmem:[%s551 + $0x8] sm:$0xf]
        %v555 = vld [vmem:[%s551 + $0xc] sm:$0xf]
        %v556 = vld [vmem:[%s551 + $0x10] sm:$0xf]
        %v557 = vld [vmem:[%s551 + $0x14] sm:$0xf]
        %v558 = vld [vmem:[%s551 + $0x18] sm:$0xf]
        %v559 = vld [vmem:[%s551 + $0x1c] sm:$0xf]
        %v560 = vld [vmem:[%s551 + $0x20] sm:$0xf]
        %v561 = vld [vmem:[%s551 + $0x24] sm:$0xf]
        %v562 = vld [vmem:[%s551 + $0x28] sm:$0xf]
        %v563 = vld [vmem:[%s551 + $0x2c] sm:$0xf]
        %v564 = vld [vmem:[%s551 + $0x30] sm:$0xf]
        %v565 = vld [vmem:[%s551 + $0x34] sm:$0xf]
        %v566 = vld [vmem:[%s551 + $0x38] sm:$0xf]
        %v567 = vld [vmem:[%s551 + $0x3c] sm:$0xf]
        %s568 = scalar_lea.vmem [#allocation7], 2
        %v569 = vld [vmem:[%s568] sm:$0x1]
        %v571 = vlaneseq
        %v572 = vshrl.u32 %v571, 7
        %v573 = vsub.s32 0, %v572
        %v574 = vrot.slane %v569, %v573
        %v592 = vunpack.c.l.b16 %v552
        %v593 = vunpack.c.l.b16 %v553
        %v594 = vunpack.c.l.b16 %v554
        %v595 = vunpack.c.l.b16 %v555
        %v596 = vunpack.c.l.b16 %v556
        %v597 = vunpack.c.l.b16 %v557
        %v598 = vunpack.c.l.b16 %v558
        %v599 = vunpack.c.l.b16 %v559
        %v600 = vunpack.c.l.b16 %v560
        %v601 = vunpack.c.l.b16 %v561
        %v602 = vunpack.c.l.b16 %v562
        %v603 = vunpack.c.l.b16 %v563
        %v604 = vunpack.c.l.b16 %v564
        %v605 = vunpack.c.l.b16 %v565
        %v606 = vunpack.c.l.b16 %v566
        %v607 = vunpack.c.l.b16 %v567
        %v608 = vpack.c.b16 %v593, %v592
        %v609 = vpack.c.b16 %v595, %v594
        %v610 = vpack.c.b16 %v597, %v596
        %v611 = vpack.c.b16 %v599, %v598
        %v612 = vpack.c.b16 %v601, %v600
        %v613 = vpack.c.b16 %v603, %v602
        %v614 = vpack.c.b16 %v605, %v604
        %v615 = vpack.c.b16 %v607, %v606
        %624 = vmatprep.subr.bf16.mxu0 0
        %625 = vmatpush1.bf16.msra.mxu0 %v608
        %626 = vmatprep.subr.bf16.mxu0 0
        %627 = vmatpush1.bf16.msra.mxu0 %v609
        %628 = vmatprep.subr.bf16.mxu0 0
        %629 = vmatpush1.bf16.msra.mxu0 %v610
        %630 = vmatprep.subr.bf16.mxu0 0
        %631 = vmatpush1.bf16.msra.mxu0 %v611
        %632 = vmatprep.subr.bf16.mxu0 0
        %633 = vmatpush1.bf16.msra.mxu0 %v612
        %634 = vmatprep.subr.bf16.mxu0 0
        %635 = vmatpush1.bf16.msra.mxu0 %v613
        %636 = vmatprep.subr.bf16.mxu0 0
        %637 = vmatpush1.bf16.msra.mxu0 %v614
        %638 = vmatprep.subr.bf16.mxu0 0
        %639 = vmatpush1.bf16.msra.mxu0 %v615
        %640 = vmatprep.subr.bf16.mxu0 0
        %641 = vmatpush1.bf16.msra.mxu0 0
        %642 = vmatprep.subr.bf16.mxu0 0
        %643 = vmatpush1.bf16.msra.mxu0 0
        %644 = vmatprep.subr.bf16.mxu0 0
        %645 = vmatpush1.bf16.msra.mxu0 0
        %646 = vmatprep.subr.bf16.mxu0 0
        %647 = vmatpush1.bf16.msra.mxu0 0
        %648 = vmatprep.subr.bf16.mxu0 0
        %649 = vmatpush1.bf16.msra.mxu0 0
        %650 = vmatprep.subr.bf16.mxu0 0
        %651 = vmatpush1.bf16.msra.mxu0 0
        %652 = vmatprep.subr.bf16.mxu0 0
        %653 = vmatpush1.bf16.msra.mxu0 0
        %654 = vmatprep.subr.bf16.mxu0 0
        %655 = vmatpush1.bf16.msra.mxu0 0
        %656 = vmatprep.mubr.bf16.mxu0 0
        %657 = vmatmul.mubr.bf16.gmra.mrb[0].mxu0 %v547
        %v658 = vpop.f32.mrb[0].mxu0
        %v659 = vadd.f32 %v574, %v658
        %v660 = vpop.f32.mrb[0].mxu0
        %v661 = vpop.f32.mrb[0].mxu0
        %v662 = vadd.f32 %v574, %v661
        %v663 = vpop.f32.mrb[0].mxu0
        %664 = vmatprep.mubr.bf16.mxu0 0
        %665 = vmatmul.mubr.bf16.gmra.mrb[0].mxu0 %v548
        %v666 = vpop.f32.mrb[0].mxu0
        %v667 = vadd.f32 %v574, %v666
        %v668 = vpop.f32.mrb[0].mxu0
        %v669 = vpop.f32.mrb[0].mxu0
        %v670 = vadd.f32 %v574, %v669
        %v671 = vpop.f32.mrb[0].mxu0
        %672 = vmatprep.mubr.bf16.mxu0 0
        %673 = vmatmul.mubr.bf16.gmra.mrb[0].mxu0 %v549
        %v674 = vpop.f32.mrb[0].mxu0
        %v675 = vadd.f32 %v574, %v674
        %v676 = vpop.f32.mrb[0].mxu0
        %v677 = vpop.f32.mrb[0].mxu0
        %v678 = vadd.f32 %v574, %v677
        %v679 = vpop.f32.mrb[0].mxu0
        %680 = vmatprep.mubr.bf16.mxu0 0
        %681 = vmatmul.mubr.bf16.gmra.mrb[0].mxu0 %v550
        %v682 = vpop.f32.mrb[0].mxu0
        %v683 = vadd.f32 %v574, %v682
        %v684 = vpop.f32.mrb[0].mxu0
        %v685 = vpop.f32.mrb[0].mxu0
        %v686 = vadd.f32 %v574, %v685
        %v687 = vpop.f32.mrb[0].mxu0
        %688 = vdwg.mxu0
        %v689 = vmax.f32 %v659, 0.0
        %v690 = vmax.f32 %v662, 0.0
        %v691 = vmax.f32 %v667, 0.0
        %v692 = vmax.f32 %v670, 0.0
        %v693 = vmax.f32 %v675, 0.0
        %v694 = vmax.f32 %v678, 0.0
        %v695 = vmax.f32 %v683, 0.0
        %v696 = vmax.f32 %v686, 0.0
        %v697 = vpack.c.bf16 %v690, %v689
        %v698 = vpack.c.bf16 %v692, %v691
        %v699 = vpack.c.bf16 %v694, %v693
        %v700 = vpack.c.bf16 %v696, %v695
        %s701 = scalar_lea.vmem [#allocation5], 192
        %v702 = vld [vmem:[%s701] sm:$0xf]
        %v703 = vld [vmem:[%s701 + $0x4] sm:$0xf]
        %v704 = vld [vmem:[%s701 + $0x8] sm:$0xf]
        %v705 = vld [vmem:[%s701 + $0xc] sm:$0xf]
        %v706 = vld [vmem:[%s701 + $0x10] sm:$0xf]
        %v707 = vld [vmem:[%s701 + $0x14] sm:$0xf]
        %v708 = vld [vmem:[%s701 + $0x18] sm:$0xf]
        %v709 = vld [vmem:[%s701 + $0x1c] sm:$0xf]
        %v710 = vld [vmem:[%s701 + $0x20] sm:$0xf]
        %v711 = vld [vmem:[%s701 + $0x24] sm:$0xf]
        %v712 = vld [vmem:[%s701 + $0x28] sm:$0xf]
        %v713 = vld [vmem:[%s701 + $0x2c] sm:$0xf]
        %v714 = vld [vmem:[%s701 + $0x30] sm:$0xf]
        %v715 = vld [vmem:[%s701 + $0x34] sm:$0xf]
        %v716 = vld [vmem:[%s701 + $0x38] sm:$0xf]
        %v717 = vld [vmem:[%s701 + $0x3c] sm:$0xf]
        %s718 = scalar_lea.vmem [#allocation7], 3
        %v719 = vld [vmem:[%s718] sm:$0x1]
        %v721 = vlaneseq
        %v722 = vshrl.u32 %v721, 7
        %v723 = vsub.s32 0, %v722
        %v724 = vrot.slane %v719, %v723
        %v742 = vunpack.c.l.b16 %v702
        %v743 = vunpack.c.l.b16 %v703
        %v744 = vunpack.c.l.b16 %v704
        %v745 = vunpack.c.l.b16 %v705
        %v746 = vunpack.c.l.b16 %v706
        %v747 = vunpack.c.l.b16 %v707
        %v748 = vunpack.c.l.b16 %v708
        %v749 = vunpack.c.l.b16 %v709
        %v750 = vunpack.c.l.b16 %v710
        %v751 = vunpack.c.l.b16 %v711
        %v752 = vunpack.c.l.b16 %v712
        %v753 = vunpack.c.l.b16 %v713
        %v754 = vunpack.c.l.b16 %v714
        %v755 = vunpack.c.l.b16 %v715
        %v756 = vunpack.c.l.b16 %v716
        %v757 = vunpack.c.l.b16 %v717
        %v758 = vpack.c.b16 %v743, %v742
        %v759 = vpack.c.b16 %v745, %v744
        %v760 = vpack.c.b16 %v747, %v746
        %v761 = vpack.c.b16 %v749, %v748
        %v762 = vpack.c.b16 %v751, %v750
        %v763 = vpack.c.b16 %v753, %v752
        %v764 = vpack.c.b16 %v755, %v754
        %v765 = vpack.c.b16 %v757, %v756
        %774 = vmatprep.subr.bf16.mxu0 0
        %775 = vmatpush1.bf16.msra.mxu0 %v758
        %776 = vmatprep.subr.bf16.mxu0 0
        %777 = vmatpush1.bf16.msra.mxu0 %v759
        %778 = vmatprep.subr.bf16.mxu0 0
        %779 = vmatpush1.bf16.msra.mxu0 %v760
        %780 = vmatprep.subr.bf16.mxu0 0
        %781 = vmatpush1.bf16.msra.mxu0 %v761
        %782 = vmatprep.subr.bf16.mxu0 0
        %783 = vmatpush1.bf16.msra.mxu0 %v762
        %784 = vmatprep.subr.bf16.mxu0 0
        %785 = vmatpush1.bf16.msra.mxu0 %v763
        %786 = vmatprep.subr.bf16.mxu0 0
        %787 = vmatpush1.bf16.msra.mxu0 %v764
        %788 = vmatprep.subr.bf16.mxu0 0
        %789 = vmatpush1.bf16.msra.mxu0 %v765
        %790 = vmatprep.subr.bf16.mxu0 0
        %791 = vmatpush1.bf16.msra.mxu0 0
        %792 = vmatprep.subr.bf16.mxu0 0
        %793 = vmatpush1.bf16.msra.mxu0 0
        %794 = vmatprep.subr.bf16.mxu0 0
        %795 = vmatpush1.bf16.msra.mxu0 0
        %796 = vmatprep.subr.bf16.mxu0 0
        %797 = vmatpush1.bf16.msra.mxu0 0
        %798 = vmatprep.subr.bf16.mxu0 0
        %799 = vmatpush1.bf16.msra.mxu0 0
        %800 = vmatprep.subr.bf16.mxu0 0
        %801 = vmatpush1.bf16.msra.mxu0 0
        %802 = vmatprep.subr.bf16.mxu0 0
        %803 = vmatpush1.bf16.msra.mxu0 0
        %804 = vmatprep.subr.bf16.mxu0 0
        %805 = vmatpush1.bf16.msra.mxu0 0
        %806 = vmatprep.mubr.bf16.mxu0 0
        %807 = vmatmul.mubr.bf16.gmra.mrb[0].mxu0 %v697
        %v808 = vpop.f32.mrb[0].mxu0
        %v809 = vadd.f32 %v724, %v808
        %v810 = vpop.f32.mrb[0].mxu0
        %v811 = vpop.f32.mrb[0].mxu0
        %v812 = vadd.f32 %v724, %v811
        %v813 = vpop.f32.mrb[0].mxu0
        %814 = vmatprep.mubr.bf16.mxu0 0
        %815 = vmatmul.mubr.bf16.gmra.mrb[0].mxu0 %v698
        %v816 = vpop.f32.mrb[0].mxu0
        %v817 = vadd.f32 %v724, %v816
        %v818 = vpop.f32.mrb[0].mxu0
        %v819 = vpop.f32.mrb[0].mxu0
        %v820 = vadd.f32 %v724, %v819
        %v821 = vpop.f32.mrb[0].mxu0
        %822 = vmatprep.mubr.bf16.mxu0 0
        %823 = vmatmul.mubr.bf16.gmra.mrb[0].mxu0 %v699
        %v824 = vpop.f32.mrb[0].mxu0
        %v825 = vadd.f32 %v724, %v824
        %v826 = vpop.f32.mrb[0].mxu0
        %v827 = vpop.f32.mrb[0].mxu0
        %v828 = vadd.f32 %v724, %v827
        %v829 = vpop.f32.mrb[0].mxu0
        %830 = vmatprep.mubr.bf16.mxu0 0
        %831 = vmatmul.mubr.bf16.gmra.mrb[0].mxu0 %v700
        %v832 = vpop.f32.mrb[0].mxu0
        %v833 = vadd.f32 %v724, %v832
        %v834 = vpop.f32.mrb[0].mxu0
        %v835 = vpop.f32.mrb[0].mxu0
        %v836 = vadd.f32 %v724, %v835
        %v837 = vpop.f32.mrb[0].mxu0
        %838 = vdwg.mxu0
        %v839 = vmax.f32 %v809, 0.0
        %v840 = vmax.f32 %v812, 0.0
        %v841 = vmax.f32 %v817, 0.0
        %v842 = vmax.f32 %v820, 0.0
        %v843 = vmax.f32 %v825, 0.0
        %v844 = vmax.f32 %v828, 0.0
        %v845 = vmax.f32 %v833, 0.0
        %v846 = vmax.f32 %v836, 0.0
        %v847 = vpack.c.bf16 %v840, %v839
        %v848 = vpack.c.bf16 %v842, %v841
        %v849 = vpack.c.bf16 %v844, %v843
        %v850 = vpack.c.bf16 %v846, %v845
        %s851 = scalar_lea.vmem [#allocation5], 256
        %v852 = vld [vmem:[%s851] sm:$0xf]
        %v853 = vld [vmem:[%s851 + $0x4] sm:$0xf]
        %v854 = vld [vmem:[%s851 + $0x8] sm:$0xf]
        %v855 = vld [vmem:[%s851 + $0xc] sm:$0xf]
        %v856 = vld [vmem:[%s851 + $0x10] sm:$0xf]
        %v857 = vld [vmem:[%s851 + $0x14] sm:$0xf]
        %v858 = vld [vmem:[%s851 + $0x18] sm:$0xf]
        %v859 = vld [vmem:[%s851 + $0x1c] sm:$0xf]
        %v860 = vld [vmem:[%s851 + $0x20] sm:$0xf]
        %v861 = vld [vmem:[%s851 + $0x24] sm:$0xf]
        %v862 = vld [vmem:[%s851 + $0x28] sm:$0xf]
        %v863 = vld [vmem:[%s851 + $0x2c] sm:$0xf]
        %v864 = vld [vmem:[%s851 + $0x30] sm:$0xf]
        %v865 = vld [vmem:[%s851 + $0x34] sm:$0xf]
        %v866 = vld [vmem:[%s851 + $0x38] sm:$0xf]
        %v867 = vld [vmem:[%s851 + $0x3c] sm:$0xf]
        %s868 = scalar_lea.vmem [#allocation7], 4
        %v869 = vld [vmem:[%s868] sm:$0x1]
        %v871 = vlaneseq
        %v872 = vshrl.u32 %v871, 7
        %v873 = vsub.s32 0, %v872
        %v874 = vrot.slane %v869, %v873
        %v892 = vunpack.c.l.b16 %v852
        %v893 = vunpack.c.l.b16 %v853
        %v894 = vunpack.c.l.b16 %v854
        %v895 = vunpack.c.l.b16 %v855
        %v896 = vunpack.c.l.b16 %v856
        %v897 = vunpack.c.l.b16 %v857
        %v898 = vunpack.c.l.b16 %v858
        %v899 = vunpack.c.l.b16 %v859
        %v900 = vunpack.c.l.b16 %v860
        %v901 = vunpack.c.l.b16 %v861
        %v902 = vunpack.c.l.b16 %v862
        %v903 = vunpack.c.l.b16 %v863
        %v904 = vunpack.c.l.b16 %v864
        %v905 = vunpack.c.l.b16 %v865
        %v906 = vunpack.c.l.b16 %v866
        %v907 = vunpack.c.l.b16 %v867
        %v908 = vpack.c.b16 %v893, %v892
        %v909 = vpack.c.b16 %v895, %v894
        %v910 = vpack.c.b16 %v897, %v896
        %v911 = vpack.c.b16 %v899, %v898
        %v912 = vpack.c.b16 %v901, %v900
        %v913 = vpack.c.b16 %v903, %v902
        %v914 = vpack.c.b16 %v905, %v904
        %v915 = vpack.c.b16 %v907, %v906
        %924 = vmatprep.subr.bf16.mxu0 0
        %925 = vmatpush1.bf16.msra.mxu0 %v908
        %926 = vmatprep.subr.bf16.mxu0 0
        %927 = vmatpush1.bf16.msra.mxu0 %v909
        %928 = vmatprep.subr.bf16.mxu0 0
        %929 = vmatpush1.bf16.msra.mxu0 %v910
        %930 = vmatprep.subr.bf16.mxu0 0
        %931 = vmatpush1.bf16.msra.mxu0 %v911
        %932 = vmatprep.subr.bf16.mxu0 0
        %933 = vmatpush1.bf16.msra.mxu0 %v912
        %934 = vmatprep.subr.bf16.mxu0 0
        %935 = vmatpush1.bf16.msra.mxu0 %v913
        %936 = vmatprep.subr.bf16.mxu0 0
        %937 = vmatpush1.bf16.msra.mxu0 %v914
        %938 = vmatprep.subr.bf16.mxu0 0
        %939 = vmatpush1.bf16.msra.mxu0 %v915
        %940 = vmatprep.subr.bf16.mxu0 0
        %941 = vmatpush1.bf16.msra.mxu0 0
        %942 = vmatprep.subr.bf16.mxu0 0
        %943 = vmatpush1.bf16.msra.mxu0 0
        %944 = vmatprep.subr.bf16.mxu0 0
        %945 = vmatpush1.bf16.msra.mxu0 0
        %946 = vmatprep.subr.bf16.mxu0 0
        %947 = vmatpush1.bf16.msra.mxu0 0
        %948 = vmatprep.subr.bf16.mxu0 0
        %949 = vmatpush1.bf16.msra.mxu0 0
        %950 = vmatprep.subr.bf16.mxu0 0
        %951 = vmatpush1.bf16.msra.mxu0 0
        %952 = vmatprep.subr.bf16.mxu0 0
        %953 = vmatpush1.bf16.msra.mxu0 0
        %954 = vmatprep.subr.bf16.mxu0 0
        %955 = vmatpush1.bf16.msra.mxu0 0
        %956 = vmatprep.mubr.bf16.mxu0 0
        %957 = vmatmul.mubr.bf16.gmra.mrb[0].mxu0 %v847
        %v958 = vpop.f32.mrb[0].mxu0
        %v959 = vadd.f32 %v874, %v958
        %v960 = vpop.f32.mrb[0].mxu0
        %v961 = vpop.f32.mrb[0].mxu0
        %v962 = vadd.f32 %v874, %v961
        %v963 = vpop.f32.mrb[0].mxu0
        %964 = vmatprep.mubr.bf16.mxu0 0
        %965 = vmatmul.mubr.bf16.gmra.mrb[0].mxu0 %v848
        %v966 = vpop.f32.mrb[0].mxu0
        %v967 = vadd.f32 %v874, %v966
        %v968 = vpop.f32.mrb[0].mxu0
        %v969 = vpop.f32.mrb[0].mxu0
        %v970 = vadd.f32 %v874, %v969
        %v971 = vpop.f32.mrb[0].mxu0
        %972 = vmatprep.mubr.bf16.mxu0 0
        %973 = vmatmul.mubr.bf16.gmra.mrb[0].mxu0 %v849
        %v974 = vpop.f32.mrb[0].mxu0
        %v975 = vadd.f32 %v874, %v974
        %v976 = vpop.f32.mrb[0].mxu0
        %v977 = vpop.f32.mrb[0].mxu0
        %v978 = vadd.f32 %v874, %v977
        %v979 = vpop.f32.mrb[0].mxu0
        %980 = vmatprep.mubr.bf16.mxu0 0
        %981 = vmatmul.mubr.bf16.gmra.mrb[0].mxu0 %v850
        %v982 = vpop.f32.mrb[0].mxu0
        %v983 = vadd.f32 %v874, %v982
        %v984 = vpop.f32.mrb[0].mxu0
        %v985 = vpop.f32.mrb[0].mxu0
        %v986 = vadd.f32 %v874, %v985
        %v987 = vpop.f32.mrb[0].mxu0
        %988 = vdwg.mxu0
        %v989 = vlaneseq
        %v990 = vand.u32 %v989, 127
        %vm991 = vcmp.ge.s32.totalorder %v990, 16
        %vm992 = vcmp.lt.s32.totalorder %v990, 20
        %vm993 = vmand %vm991, %vm992
        %vm994 = vcmp.ge.s32.totalorder %v990, 20
        %vm995 = vcmp.lt.s32.totalorder %v990, 24
        %vm996 = vmand %vm994, %vm995
        %v997 = vsel %vm993, 1, 0
        %vm998 = vcmp.eq.s32.totalorder %v997, 1
        %v999 = vsel %vm998, %v959, 0.0
        %v1000 = vsel %vm998, %v962, 0.0
        %v1001 = vsel %vm998, %v967, 0.0
        %v1002 = vsel %vm998, %v970, 0.0
        %v1003 = vsel %vm998, %v975, 0.0
        %v1004 = vsel %vm998, %v978, 0.0
        %v1005 = vsel %vm998, %v983, 0.0
        %v1006 = vsel %vm998, %v986, 0.0
        %v1007 = vmul.f32 %v999, 0.5
        %v1008 = vmul.f32 %v1000, 0.5
        %v1009 = vmul.f32 %v1001, 0.5
        %v1010 = vmul.f32 %v1002, 0.5
        %v1011 = vmul.f32 %v1003, 0.5
        %v1012 = vmul.f32 %v1004, 0.5
        %v1013 = vmul.f32 %v1005, 0.5
        %v1014 = vmul.f32 %v1006, 0.5
        %v1015 = vmul.f32 %v1007, 1.442695
        %v1016 = vpow.pop %v1015
        %v1017 = vmul.f32 %v1008, 1.442695
        %v1018 = vpow.pop %v1017
        %v1019 = vmul.f32 %v1009, 1.442695
        %v1020 = vpow.pop %v1019
        %v1021 = vmul.f32 %v1010, 1.442695
        %v1022 = vpow.pop %v1021
        %v1023 = vmul.f32 %v1011, 1.442695
        %v1024 = vpow.pop %v1023
        %v1025 = vmul.f32 %v1012, 1.442695
        %v1026 = vpow.pop %v1025
        %v1027 = vmul.f32 %v1013, 1.442695
        %v1028 = vpow.pop %v1027
        %v1029 = vmul.f32 %v1014, 1.442695
        %v1030 = vpow.pop %v1029
        %v1031 = vunpack.c.l.bf16 %v221
        %v1032 = vunpack.c.l.bf16 %v222
        %v1033 = vunpack.c.l.bf16 %v223
        %v1034 = vunpack.c.l.bf16 %v224
        %v1035 = vunpack.c.l.bf16 %v225
        %v1036 = vunpack.c.l.bf16 %v226
        %v1037 = vunpack.c.l.bf16 %v227
        %v1038 = vunpack.c.l.bf16 %v228
        %v1039 = vmul.f32 %v1031, %v1016
        %v1040 = vmul.f32 %v1032, %v1018
        %v1041 = vmul.f32 %v1033, %v1020
        %v1042 = vmul.f32 %v1034, %v1022
        %v1043 = vmul.f32 %v1035, %v1024
        %v1044 = vmul.f32 %v1036, %v1026
        %v1045 = vmul.f32 %v1037, %v1028
        %v1046 = vmul.f32 %v1038, %v1030
        %v1047 = vsel %vm996, 1, 0
        %vm1048 = vcmp.eq.s32.totalorder %v1047, 1
        %v1049 = vsel %vm1048, %v959, 0.0
        %v1050 = vsel %vm1048, %v962, 0.0
        %v1051 = vsel %vm1048, %v967, 0.0
        %v1052 = vsel %vm1048, %v970, 0.0
        %v1053 = vsel %vm1048, %v975, 0.0
        %v1054 = vsel %vm1048, %v978, 0.0
        %v1055 = vsel %vm1048, %v983, 0.0
        %v1056 = vsel %vm1048, %v986, 0.0
        %v1057 = vadd.f32 %v1039, %v1049
        %v1058 = vadd.f32 %v1040, %v1050
        %v1059 = vadd.f32 %v1041, %v1051
        %v1060 = vadd.f32 %v1042, %v1052
        %v1061 = vadd.f32 %v1043, %v1053
        %v1062 = vadd.f32 %v1044, %v1054
        %v1063 = vadd.f32 %v1045, %v1055
        %v1064 = vadd.f32 %v1046, %v1056
        %v1065 = vpack.c.bf16 %v1058, %v1057
        %v1066 = vpack.c.bf16 %v1060, %v1059
        %v1067 = vpack.c.bf16 %v1062, %v1061
        %v1068 = vpack.c.bf16 %v1064, %v1063
        %s1069 = scalar_lea.vmem [#allocation5], 320
        %v1070 = vld [vmem:[%s1069] sm:$0xf]
        %v1071 = vld [vmem:[%s1069 + $0x4] sm:$0xf]
        %v1072 = vld [vmem:[%s1069 + $0x8] sm:$0xf]
        %v1073 = vld [vmem:[%s1069 + $0xc] sm:$0xf]
        %v1074 = vld [vmem:[%s1069 + $0x10] sm:$0xf]
        %v1075 = vld [vmem:[%s1069 + $0x14] sm:$0xf]
        %v1076 = vld [vmem:[%s1069 + $0x18] sm:$0xf]
        %v1077 = vld [vmem:[%s1069 + $0x1c] sm:$0xf]
        %v1078 = vld [vmem:[%s1069 + $0x20] sm:$0xf]
        %v1079 = vld [vmem:[%s1069 + $0x24] sm:$0xf]
        %v1080 = vld [vmem:[%s1069 + $0x28] sm:$0xf]
        %v1081 = vld [vmem:[%s1069 + $0x2c] sm:$0xf]
        %v1082 = vld [vmem:[%s1069 + $0x30] sm:$0xf]
        %v1083 = vld [vmem:[%s1069 + $0x34] sm:$0xf]
        %v1084 = vld [vmem:[%s1069 + $0x38] sm:$0xf]
        %v1085 = vld [vmem:[%s1069 + $0x3c] sm:$0xf]
        %s1086 = scalar_lea.vmem [#allocation7], 5
        %v1087 = vld [vmem:[%s1086] sm:$0x1]
        %v1089 = vlaneseq
        %v1090 = vshrl.u32 %v1089, 7
        %v1091 = vsub.s32 0, %v1090
        %v1092 = vrot.slane %v1087, %v1091
        %v1110 = vunpack.c.l.b16 %v1070
        %v1111 = vunpack.c.l.b16 %v1071
        %v1112 = vunpack.c.l.b16 %v1072
        %v1113 = vunpack.c.l.b16 %v1073
        %v1114 = vunpack.c.l.b16 %v1074
        %v1115 = vunpack.c.l.b16 %v1075
        %v1116 = vunpack.c.l.b16 %v1076
        %v1117 = vunpack.c.l.b16 %v1077
        %v1118 = vunpack.c.l.b16 %v1078
        %v1119 = vunpack.c.l.b16 %v1079
        %v1120 = vunpack.c.l.b16 %v1080
        %v1121 = vunpack.c.l.b16 %v1081
        %v1122 = vunpack.c.l.b16 %v1082
        %v1123 = vunpack.c.l.b16 %v1083
        %v1124 = vunpack.c.l.b16 %v1084
        %v1125 = vunpack.c.l.b16 %v1085
        %v1126 = vpack.c.b16 %v1111, %v1110
        %v1127 = vpack.c.b16 %v1113, %v1112
        %v1128 = vpack.c.b16 %v1115, %v1114
        %v1129 = vpack.c.b16 %v1117, %v1116
        %v1130 = vpack.c.b16 %v1119, %v1118
        %v1131 = vpack.c.b16 %v1121, %v1120
        %v1132 = vpack.c.b16 %v1123, %v1122
        %v1133 = vpack.c.b16 %v1125, %v1124
        %1142 = vmatprep.subr.bf16.mxu0 0
        %1143 = vmatpush1.bf16.msra.mxu0 %v1126
        %1144 = vmatprep.subr.bf16.mxu0 0
        %1145 = vmatpush1.bf16.msra.mxu0 %v1127
        %1146 = vmatprep.subr.bf16.mxu0 0
        %1147 = vmatpush1.bf16.msra.mxu0 %v1128
        %1148 = vmatprep.subr.bf16.mxu0 0
        %1149 = vmatpush1.bf16.msra.mxu0 %v1129
        %1150 = vmatprep.subr.bf16.mxu0 0
        %1151 = vmatpush1.bf16.msra.mxu0 %v1130
        %1152 = vmatprep.subr.bf16.mxu0 0
        %1153 = vmatpush1.bf16.msra.mxu0 %v1131
        %1154 = vmatprep.subr.bf16.mxu0 0
        %1155 = vmatpush1.bf16.msra.mxu0 %v1132
        %1156 = vmatprep.subr.bf16.mxu0 0
        %1157 = vmatpush1.bf16.msra.mxu0 %v1133
        %1158 = vmatprep.subr.bf16.mxu0 0
        %1159 = vmatpush1.bf16.msra.mxu0 0
        %1160 = vmatprep.subr.bf16.mxu0 0
        %1161 = vmatpush1.bf16.msra.mxu0 0
        %1162 = vmatprep.subr.bf16.mxu0 0
        %1163 = vmatpush1.bf16.msra.mxu0 0
        %1164 = vmatprep.subr.bf16.mxu0 0
        %1165 = vmatpush1.bf16.msra.mxu0 0
        %1166 = vmatprep.subr.bf16.mxu0 0
        %1167 = vmatpush1.bf16.msra.mxu0 0
        %1168 = vmatprep.subr.bf16.mxu0 0
        %1169 = vmatpush1.bf16.msra.mxu0 0
        %1170 = vmatprep.subr.bf16.mxu0 0
        %1171 = vmatpush1.bf16.msra.mxu0 0
        %1172 = vmatprep.subr.bf16.mxu0 0
        %1173 = vmatpush1.bf16.msra.mxu0 0
        %1174 = vmatprep.mubr.bf16.mxu0 0
        %1175 = vmatmul.mubr.bf16.gmra.mrb[0].mxu0 %v1065
        %v1176 = vpop.f32.mrb[0].mxu0
        %v1177 = vadd.f32 %v1092, %v1176
        %v1178 = vpop.f32.mrb[0].mxu0
        %v1179 = vpop.f32.mrb[0].mxu0
        %v1180 = vadd.f32 %v1092, %v1179
        %v1181 = vpop.f32.mrb[0].mxu0
        %1182 = vmatprep.mubr.bf16.mxu0 0
        %1183 = vmatmul.mubr.bf16.gmra.mrb[0].mxu0 %v1066
        %v1184 = vpop.f32.mrb[0].mxu0
        %v1185 = vadd.f32 %v1092, %v1184
        %v1186 = vpop.f32.mrb[0].mxu0
        %v1187 = vpop.f32.mrb[0].mxu0
        %v1188 = vadd.f32 %v1092, %v1187
        %v1189 = vpop.f32.mrb[0].mxu0
        %1190 = vmatprep.mubr.bf16.mxu0 0
        %1191 = vmatmul.mubr.bf16.gmra.mrb[0].mxu0 %v1067
        %v1192 = vpop.f32.mrb[0].mxu0
        %v1193 = vadd.f32 %v1092, %v1192
        %v1194 = vpop.f32.mrb[0].mxu0
        %v1195 = vpop.f32.mrb[0].mxu0
        %v1196 = vadd.f32 %v1092, %v1195
        %v1197 = vpop.f32.mrb[0].mxu0
        %1198 = vmatprep.mubr.bf16.mxu0 0
        %1199 = vmatmul.mubr.bf16.gmra.mrb[0].mxu0 %v1068
        %v1200 = vpop.f32.mrb[0].mxu0
        %v1201 = vadd.f32 %v1092, %v1200
        %v1202 = vpop.f32.mrb[0].mxu0
        %v1203 = vpop.f32.mrb[0].mxu0
        %v1204 = vadd.f32 %v1092, %v1203
        %v1205 = vpop.f32.mrb[0].mxu0
        %1206 = vdwg.mxu0
        %v1207 = vmax.f32 %v1177, 0.0
        %v1208 = vmax.f32 %v1180, 0.0
        %v1209 = vmax.f32 %v1185, 0.0
        %v1210 = vmax.f32 %v1188, 0.0
        %v1211 = vmax.f32 %v1193, 0.0
        %v1212 = vmax.f32 %v1196, 0.0
        %v1213 = vmax.f32 %v1201, 0.0
        %v1214 = vmax.f32 %v1204, 0.0
        %v1215 = vpack.c.bf16 %v1208, %v1207
        %v1216 = vpack.c.bf16 %v1210, %v1209
        %v1217 = vpack.c.bf16 %v1212, %v1211
        %v1218 = vpack.c.bf16 %v1214, %v1213
        %s1219 = scalar_lea.vmem [#allocation5], 384
        %v1220 = vld [vmem:[%s1219] sm:$0xf]
        %v1221 = vld [vmem:[%s1219 + $0x4] sm:$0xf]
        %v1222 = vld [vmem:[%s1219 + $0x8] sm:$0xf]
        %v1223 = vld [vmem:[%s1219 + $0xc] sm:$0xf]
        %v1224 = vld [vmem:[%s1219 + $0x10] sm:$0xf]
        %v1225 = vld [vmem:[%s1219 + $0x14] sm:$0xf]
        %v1226 = vld [vmem:[%s1219 + $0x18] sm:$0xf]
        %v1227 = vld [vmem:[%s1219 + $0x1c] sm:$0xf]
        %v1228 = vld [vmem:[%s1219 + $0x20] sm:$0xf]
        %v1229 = vld [vmem:[%s1219 + $0x24] sm:$0xf]
        %v1230 = vld [vmem:[%s1219 + $0x28] sm:$0xf]
        %v1231 = vld [vmem:[%s1219 + $0x2c] sm:$0xf]
        %v1232 = vld [vmem:[%s1219 + $0x30] sm:$0xf]
        %v1233 = vld [vmem:[%s1219 + $0x34] sm:$0xf]
        %v1234 = vld [vmem:[%s1219 + $0x38] sm:$0xf]
        %v1235 = vld [vmem:[%s1219 + $0x3c] sm:$0xf]
        %s1236 = scalar_lea.vmem [#allocation7], 6
        %v1237 = vld [vmem:[%s1236] sm:$0x1]
        %v1239 = vlaneseq
        %v1240 = vshrl.u32 %v1239, 7
        %v1241 = vsub.s32 0, %v1240
        %v1242 = vrot.slane %v1237, %v1241
        %v1260 = vunpack.c.l.b16 %v1220
        %v1261 = vunpack.c.l.b16 %v1221
        %v1262 = vunpack.c.l.b16 %v1222
        %v1263 = vunpack.c.l.b16 %v1223
        %v1264 = vunpack.c.l.b16 %v1224
        %v1265 = vunpack.c.l.b16 %v1225
        %v1266 = vunpack.c.l.b16 %v1226
        %v1267 = vunpack.c.l.b16 %v1227
        %v1268 = vunpack.c.l.b16 %v1228
        %v1269 = vunpack.c.l.b16 %v1229
        %v1270 = vunpack.c.l.b16 %v1230
        %v1271 = vunpack.c.l.b16 %v1231
        %v1272 = vunpack.c.l.b16 %v1232
        %v1273 = vunpack.c.l.b16 %v1233
        %v1274 = vunpack.c.l.b16 %v1234
        %v1275 = vunpack.c.l.b16 %v1235
        %v1276 = vpack.c.b16 %v1261, %v1260
        %v1277 = vpack.c.b16 %v1263, %v1262
        %v1278 = vpack.c.b16 %v1265, %v1264
        %v1279 = vpack.c.b16 %v1267, %v1266
        %v1280 = vpack.c.b16 %v1269, %v1268
        %v1281 = vpack.c.b16 %v1271, %v1270
        %v1282 = vpack.c.b16 %v1273, %v1272
        %v1283 = vpack.c.b16 %v1275, %v1274
        %1292 = vmatprep.subr.bf16.mxu0 0
        %1293 = vmatpush1.bf16.msra.mxu0 %v1276
        %1294 = vmatprep.subr.bf16.mxu0 0
        %1295 = vmatpush1.bf16.msra.mxu0 %v1277
        %1296 = vmatprep.subr.bf16.mxu0 0
        %1297 = vmatpush1.bf16.msra.mxu0 %v1278
        %1298 = vmatprep.subr.bf16.mxu0 0
        %1299 = vmatpush1.bf16.msra.mxu0 %v1279
        %1300 = vmatprep.subr.bf16.mxu0 0
        %1301 = vmatpush1.bf16.msra.mxu0 %v1280
        %1302 = vmatprep.subr.bf16.mxu0 0
        %1303 = vmatpush1.bf16.msra.mxu0 %v1281
        %1304 = vmatprep.subr.bf16.mxu0 0
        %1305 = vmatpush1.bf16.msra.mxu0 %v1282
        %1306 = vmatprep.subr.bf16.mxu0 0
        %1307 = vmatpush1.bf16.msra.mxu0 %v1283
        %1308 = vmatprep.subr.bf16.mxu0 0
        %1309 = vmatpush1.bf16.msra.mxu0 0
        %1310 = vmatprep.subr.bf16.mxu0 0
        %1311 = vmatpush1.bf16.msra.mxu0 0
        %1312 = vmatprep.subr.bf16.mxu0 0
        %1313 = vmatpush1.bf16.msra.mxu0 0
        %1314 = vmatprep.subr.bf16.mxu0 0
        %1315 = vmatpush1.bf16.msra.mxu0 0
        %1316 = vmatprep.subr.bf16.mxu0 0
        %1317 = vmatpush1.bf16.msra.mxu0 0
        %1318 = vmatprep.subr.bf16.mxu0 0
        %1319 = vmatpush1.bf16.msra.mxu0 0
        %1320 = vmatprep.subr.bf16.mxu0 0
        %1321 = vmatpush1.bf16.msra.mxu0 0
        %1322 = vmatprep.subr.bf16.mxu0 0
        %1323 = vmatpush1.bf16.msra.mxu0 0
        %1324 = vmatprep.mubr.bf16.mxu0 0
        %1325 = vmatmul.mubr.bf16.gmra.mrb[0].mxu0 %v1215
        %v1326 = vpop.f32.mrb[0].mxu0
        %v1327 = vadd.f32 %v1242, %v1326
        %v1328 = vpop.f32.mrb[0].mxu0
        %v1329 = vpop.f32.mrb[0].mxu0
        %v1330 = vadd.f32 %v1242, %v1329
        %v1331 = vpop.f32.mrb[0].mxu0
        %1332 = vmatprep.mubr.bf16.mxu0 0
        %1333 = vmatmul.mubr.bf16.gmra.mrb[0].mxu0 %v1216
        %v1334 = vpop.f32.mrb[0].mxu0
        %v1335 = vadd.f32 %v1242, %v1334
        %v1336 = vpop.f32.mrb[0].mxu0
        %v1337 = vpop.f32.mrb[0].mxu0
        %v1338 = vadd.f32 %v1242, %v1337
        %v1339 = vpop.f32.mrb[0].mxu0
        %1340 = vmatprep.mubr.bf16.mxu0 0
        %1341 = vmatmul.mubr.bf16.gmra.mrb[0].mxu0 %v1217
        %v1342 = vpop.f32.mrb[0].mxu0
        %v1343 = vadd.f32 %v1242, %v1342
        %v1344 = vpop.f32.mrb[0].mxu0
        %v1345 = vpop.f32.mrb[0].mxu0
        %v1346 = vadd.f32 %v1242, %v1345
        %v1347 = vpop.f32.mrb[0].mxu0
        %1348 = vmatprep.mubr.bf16.mxu0 0
        %1349 = vmatmul.mubr.bf16.gmra.mrb[0].mxu0 %v1218
        %v1350 = vpop.f32.mrb[0].mxu0
        %v1351 = vadd.f32 %v1242, %v1350
        %v1352 = vpop.f32.mrb[0].mxu0
        %v1353 = vpop.f32.mrb[0].mxu0
        %v1354 = vadd.f32 %v1242, %v1353
        %v1355 = vpop.f32.mrb[0].mxu0
        %1356 = vdwg.mxu0
        %v1357 = vmax.f32 %v1327, 0.0
        %v1358 = vmax.f32 %v1330, 0.0
        %v1359 = vmax.f32 %v1335, 0.0
        %v1360 = vmax.f32 %v1338, 0.0
        %v1361 = vmax.f32 %v1343, 0.0
        %v1362 = vmax.f32 %v1346, 0.0
        %v1363 = vmax.f32 %v1351, 0.0
        %v1364 = vmax.f32 %v1354, 0.0
        %v1365 = vpack.c.bf16 %v1358, %v1357
        %v1366 = vpack.c.bf16 %v1360, %v1359
        %v1367 = vpack.c.bf16 %v1362, %v1361
        %v1368 = vpack.c.bf16 %v1364, %v1363
        %s1369 = scalar_lea.vmem [#allocation5], 448
        %v1370 = vld [vmem:[%s1369] sm:$0xf]
        %v1371 = vld [vmem:[%s1369 + $0x4] sm:$0xf]
        %v1372 = vld [vmem:[%s1369 + $0x8] sm:$0xf]
        %v1373 = vld [vmem:[%s1369 + $0xc] sm:$0xf]
        %v1374 = vld [vmem:[%s1369 + $0x10] sm:$0xf]
        %v1375 = vld [vmem:[%s1369 + $0x14] sm:$0xf]
        %v1376 = vld [vmem:[%s1369 + $0x18] sm:$0xf]
        %v1377 = vld [vmem:[%s1369 + $0x1c] sm:$0xf]
        %v1378 = vld [vmem:[%s1369 + $0x20] sm:$0xf]
        %v1379 = vld [vmem:[%s1369 + $0x24] sm:$0xf]
        %v1380 = vld [vmem:[%s1369 + $0x28] sm:$0xf]
        %v1381 = vld [vmem:[%s1369 + $0x2c] sm:$0xf]
        %v1382 = vld [vmem:[%s1369 + $0x30] sm:$0xf]
        %v1383 = vld [vmem:[%s1369 + $0x34] sm:$0xf]
        %v1384 = vld [vmem:[%s1369 + $0x38] sm:$0xf]
        %v1385 = vld [vmem:[%s1369 + $0x3c] sm:$0xf]
        %s1386 = scalar_lea.vmem [#allocation7], 7
        %v1387 = vld [vmem:[%s1386] sm:$0x1]
        %v1389 = vlaneseq
        %v1390 = vshrl.u32 %v1389, 7
        %v1391 = vsub.s32 0, %v1390
        %v1392 = vrot.slane %v1387, %v1391
        %v1410 = vunpack.c.l.b16 %v1370
        %v1411 = vunpack.c.l.b16 %v1371
        %v1412 = vunpack.c.l.b16 %v1372
        %v1413 = vunpack.c.l.b16 %v1373
        %v1414 = vunpack.c.l.b16 %v1374
        %v1415 = vunpack.c.l.b16 %v1375
        %v1416 = vunpack.c.l.b16 %v1376
        %v1417 = vunpack.c.l.b16 %v1377
        %v1418 = vunpack.c.l.b16 %v1378
        %v1419 = vunpack.c.l.b16 %v1379
        %v1420 = vunpack.c.l.b16 %v1380
        %v1421 = vunpack.c.l.b16 %v1381
        %v1422 = vunpack.c.l.b16 %v1382
        %v1423 = vunpack.c.l.b16 %v1383
        %v1424 = vunpack.c.l.b16 %v1384
        %v1425 = vunpack.c.l.b16 %v1385
        %v1426 = vpack.c.b16 %v1411, %v1410
        %v1427 = vpack.c.b16 %v1413, %v1412
        %v1428 = vpack.c.b16 %v1415, %v1414
        %v1429 = vpack.c.b16 %v1417, %v1416
        %v1430 = vpack.c.b16 %v1419, %v1418
        %v1431 = vpack.c.b16 %v1421, %v1420
        %v1432 = vpack.c.b16 %v1423, %v1422
        %v1433 = vpack.c.b16 %v1425, %v1424
        %1442 = vmatprep.subr.bf16.mxu0 0
        %1443 = vmatpush1.bf16.msra.mxu0 %v1426
        %1444 = vmatprep.subr.bf16.mxu0 0
        %1445 = vmatpush1.bf16.msra.mxu0 %v1427
        %1446 = vmatprep.subr.bf16.mxu0 0
        %1447 = vmatpush1.bf16.msra.mxu0 %v1428
        %1448 = vmatprep.subr.bf16.mxu0 0
        %1449 = vmatpush1.bf16.msra.mxu0 %v1429
        %1450 = vmatprep.subr.bf16.mxu0 0
        %1451 = vmatpush1.bf16.msra.mxu0 %v1430
        %1452 = vmatprep.subr.bf16.mxu0 0
        %1453 = vmatpush1.bf16.msra.mxu0 %v1431
        %1454 = vmatprep.subr.bf16.mxu0 0
        %1455 = vmatpush1.bf16.msra.mxu0 %v1432
        %1456 = vmatprep.subr.bf16.mxu0 0
        %1457 = vmatpush1.bf16.msra.mxu0 %v1433
        %1458 = vmatprep.subr.bf16.mxu0 0
        %1459 = vmatpush1.bf16.msra.mxu0 0
        %1460 = vmatprep.subr.bf16.mxu0 0
        %1461 = vmatpush1.bf16.msra.mxu0 0
        %1462 = vmatprep.subr.bf16.mxu0 0
        %1463 = vmatpush1.bf16.msra.mxu0 0
        %1464 = vmatprep.subr.bf16.mxu0 0
        %1465 = vmatpush1.bf16.msra.mxu0 0
        %1466 = vmatprep.subr.bf16.mxu0 0
        %1467 = vmatpush1.bf16.msra.mxu0 0
        %1468 = vmatprep.subr.bf16.mxu0 0
        %1469 = vmatpush1.bf16.msra.mxu0 0
        %1470 = vmatprep.subr.bf16.mxu0 0
        %1471 = vmatpush1.bf16.msra.mxu0 0
        %1472 = vmatprep.subr.bf16.mxu0 0
        %1473 = vmatpush1.bf16.msra.mxu0 0
        %1474 = vmatprep.mubr.bf16.mxu0 0
        %1475 = vmatmul.mubr.bf16.gmra.mrb[0].mxu0 %v1365
        %v1476 = vpop.f32.mrb[0].mxu0
        %v1477 = vadd.f32 %v1392, %v1476
        %v1478 = vpop.f32.mrb[0].mxu0
        %v1479 = vpop.f32.mrb[0].mxu0
        %v1480 = vadd.f32 %v1392, %v1479
        %v1481 = vpop.f32.mrb[0].mxu0
        %1482 = vmatprep.mubr.bf16.mxu0 0
        %1483 = vmatmul.mubr.bf16.gmra.mrb[0].mxu0 %v1366
        %v1484 = vpop.f32.mrb[0].mxu0
        %v1485 = vadd.f32 %v1392, %v1484
        %v1486 = vpop.f32.mrb[0].mxu0
        %v1487 = vpop.f32.mrb[0].mxu0
        %v1488 = vadd.f32 %v1392, %v1487
        %v1489 = vpop.f32.mrb[0].mxu0
        %1490 = vmatprep.mubr.bf16.mxu0 0
        %1491 = vmatmul.mubr.bf16.gmra.mrb[0].mxu0 %v1367
        %v1492 = vpop.f32.mrb[0].mxu0
        %v1493 = vadd.f32 %v1392, %v1492
        %v1494 = vpop.f32.mrb[0].mxu0
        %v1495 = vpop.f32.mrb[0].mxu0
        %v1496 = vadd.f32 %v1392, %v1495
        %v1497 = vpop.f32.mrb[0].mxu0
        %1498 = vmatprep.mubr.bf16.mxu0 0
        %1499 = vmatmul.mubr.bf16.gmra.mrb[0].mxu0 %v1368
        %v1500 = vpop.f32.mrb[0].mxu0
        %v1501 = vadd.f32 %v1392, %v1500
        %v1502 = vpop.f32.mrb[0].mxu0
        %v1503 = vpop.f32.mrb[0].mxu0
        %v1504 = vadd.f32 %v1392, %v1503
        %v1505 = vpop.f32.mrb[0].mxu0
        %1506 = vdwg.mxu0
        %v1507 = vmax.f32 %v1477, 0.0
        %v1508 = vmax.f32 %v1480, 0.0
        %v1509 = vmax.f32 %v1485, 0.0
        %v1510 = vmax.f32 %v1488, 0.0
        %v1511 = vmax.f32 %v1493, 0.0
        %v1512 = vmax.f32 %v1496, 0.0
        %v1513 = vmax.f32 %v1501, 0.0
        %v1514 = vmax.f32 %v1504, 0.0
        %v1515 = vpack.c.bf16 %v1508, %v1507
        %v1516 = vpack.c.bf16 %v1510, %v1509
        %v1517 = vpack.c.bf16 %v1512, %v1511
        %v1518 = vpack.c.bf16 %v1514, %v1513
        %s1519 = scalar_lea.vmem [#allocation5], 512
        %v1520 = vld [vmem:[%s1519] sm:$0xf]
        %v1521 = vld [vmem:[%s1519 + $0x4] sm:$0xf]
        %v1522 = vld [vmem:[%s1519 + $0x8] sm:$0xf]
        %v1523 = vld [vmem:[%s1519 + $0xc] sm:$0xf]
        %v1524 = vld [vmem:[%s1519 + $0x10] sm:$0xf]
        %v1525 = vld [vmem:[%s1519 + $0x14] sm:$0xf]
        %v1526 = vld [vmem:[%s1519 + $0x18] sm:$0xf]
        %v1527 = vld [vmem:[%s1519 + $0x1c] sm:$0xf]
        %v1528 = vld [vmem:[%s1519 + $0x20] sm:$0xf]
        %v1529 = vld [vmem:[%s1519 + $0x24] sm:$0xf]
        %v1530 = vld [vmem:[%s1519 + $0x28] sm:$0xf]
        %v1531 = vld [vmem:[%s1519 + $0x2c] sm:$0xf]
        %v1532 = vld [vmem:[%s1519 + $0x30] sm:$0xf]
        %v1533 = vld [vmem:[%s1519 + $0x34] sm:$0xf]
        %v1534 = vld [vmem:[%s1519 + $0x38] sm:$0xf]
        %v1535 = vld [vmem:[%s1519 + $0x3c] sm:$0xf]
        %s1536 = scalar_lea.vmem [#allocation7], 8
        %v1537 = vld [vmem:[%s1536] sm:$0x1]
        %v1539 = vlaneseq
        %v1540 = vshrl.u32 %v1539, 7
        %v1541 = vsub.s32 0, %v1540
        %v1542 = vrot.slane %v1537, %v1541
        %v1560 = vunpack.c.l.b16 %v1520
        %v1561 = vunpack.c.l.b16 %v1521
        %v1562 = vunpack.c.l.b16 %v1522
        %v1563 = vunpack.c.l.b16 %v1523
        %v1564 = vunpack.c.l.b16 %v1524
        %v1565 = vunpack.c.l.b16 %v1525
        %v1566 = vunpack.c.l.b16 %v1526
        %v1567 = vunpack.c.l.b16 %v1527
        %v1568 = vunpack.c.l.b16 %v1528
        %v1569 = vunpack.c.l.b16 %v1529
        %v1570 = vunpack.c.l.b16 %v1530
        %v1571 = vunpack.c.l.b16 %v1531
        %v1572 = vunpack.c.l.b16 %v1532
        %v1573 = vunpack.c.l.b16 %v1533
        %v1574 = vunpack.c.l.b16 %v1534
        %v1575 = vunpack.c.l.b16 %v1535
        %v1576 = vpack.c.b16 %v1561, %v1560
        %v1577 = vpack.c.b16 %v1563, %v1562
        %v1578 = vpack.c.b16 %v1565, %v1564
        %v1579 = vpack.c.b16 %v1567, %v1566
        %v1580 = vpack.c.b16 %v1569, %v1568
        %v1581 = vpack.c.b16 %v1571, %v1570
        %v1582 = vpack.c.b16 %v1573, %v1572
        %v1583 = vpack.c.b16 %v1575, %v1574
        %1592 = vmatprep.subr.bf16.mxu0 0
        %1593 = vmatpush1.bf16.msra.mxu0 %v1576
        %1594 = vmatprep.subr.bf16.mxu0 0
        %1595 = vmatpush1.bf16.msra.mxu0 %v1577
        %1596 = vmatprep.subr.bf16.mxu0 0
        %1597 = vmatpush1.bf16.msra.mxu0 %v1578
        %1598 = vmatprep.subr.bf16.mxu0 0
        %1599 = vmatpush1.bf16.msra.mxu0 %v1579
        %1600 = vmatprep.subr.bf16.mxu0 0
        %1601 = vmatpush1.bf16.msra.mxu0 %v1580
        %1602 = vmatprep.subr.bf16.mxu0 0
        %1603 = vmatpush1.bf16.msra.mxu0 %v1581
        %1604 = vmatprep.subr.bf16.mxu0 0
        %1605 = vmatpush1.bf16.msra.mxu0 %v1582
        %1606 = vmatprep.subr.bf16.mxu0 0
        %1607 = vmatpush1.bf16.msra.mxu0 %v1583
        %1608 = vmatprep.subr.bf16.mxu0 0
        %1609 = vmatpush1.bf16.msra.mxu0 0
        %1610 = vmatprep.subr.bf16.mxu0 0
        %1611 = vmatpush1.bf16.msra.mxu0 0
        %1612 = vmatprep.subr.bf16.mxu0 0
        %1613 = vmatpush1.bf16.msra.mxu0 0
        %1614 = vmatprep.subr.bf16.mxu0 0
        %1615 = vmatpush1.bf16.msra.mxu0 0
        %1616 = vmatprep.subr.bf16.mxu0 0
        %1617 = vmatpush1.bf16.msra.mxu0 0
        %1618 = vmatprep.subr.bf16.mxu0 0
        %1619 = vmatpush1.bf16.msra.mxu0 0
        %1620 = vmatprep.subr.bf16.mxu0 0
        %1621 = vmatpush1.bf16.msra.mxu0 0
        %1622 = vmatprep.subr.bf16.mxu0 0
        %1623 = vmatpush1.bf16.msra.mxu0 0
        %1624 = vmatprep.mubr.bf16.mxu0 0
        %1625 = vmatmul.mubr.bf16.gmra.mrb[0].mxu0 %v1515
        %v1626 = vpop.f32.mrb[0].mxu0
        %v1627 = vadd.f32 %v1542, %v1626
        %v1628 = vpop.f32.mrb[0].mxu0
        %v1629 = vpop.f32.mrb[0].mxu0
        %v1630 = vadd.f32 %v1542, %v1629
        %v1631 = vpop.f32.mrb[0].mxu0
        %1632 = vmatprep.mubr.bf16.mxu0 0
        %1633 = vmatmul.mubr.bf16.gmra.mrb[0].mxu0 %v1516
        %v1634 = vpop.f32.mrb[0].mxu0
        %v1635 = vadd.f32 %v1542, %v1634
        %v1636 = vpop.f32.mrb[0].mxu0
        %v1637 = vpop.f32.mrb[0].mxu0
        %v1638 = vadd.f32 %v1542, %v1637
        %v1639 = vpop.f32.mrb[0].mxu0
        %1640 = vmatprep.mubr.bf16.mxu0 0
        %1641 = vmatmul.mubr.bf16.gmra.mrb[0].mxu0 %v1517
        %v1642 = vpop.f32.mrb[0].mxu0
        %v1643 = vadd.f32 %v1542, %v1642
        %v1644 = vpop.f32.mrb[0].mxu0
        %v1645 = vpop.f32.mrb[0].mxu0
        %v1646 = vadd.f32 %v1542, %v1645
        %v1647 = vpop.f32.mrb[0].mxu0
        %1648 = vmatprep.mubr.bf16.mxu0 0
        %1649 = vmatmul.mubr.bf16.gmra.mrb[0].mxu0 %v1518
        %v1650 = vpop.f32.mrb[0].mxu0
        %v1651 = vadd.f32 %v1542, %v1650
        %v1652 = vpop.f32.mrb[0].mxu0
        %v1653 = vpop.f32.mrb[0].mxu0
        %v1654 = vadd.f32 %v1542, %v1653
        %v1655 = vpop.f32.mrb[0].mxu0
        %1656 = vdwg.mxu0
        %v1657 = vmax.f32 %v1627, 0.0
        %v1658 = vmax.f32 %v1630, 0.0
        %v1659 = vmax.f32 %v1635, 0.0
        %v1660 = vmax.f32 %v1638, 0.0
        %v1661 = vmax.f32 %v1643, 0.0
        %v1662 = vmax.f32 %v1646, 0.0
        %v1663 = vmax.f32 %v1651, 0.0
        %v1664 = vmax.f32 %v1654, 0.0
        %v1665 = vpack.c.bf16 %v1658, %v1657
        %v1666 = vpack.c.bf16 %v1660, %v1659
        %v1667 = vpack.c.bf16 %v1662, %v1661
        %v1668 = vpack.c.bf16 %v1664, %v1663
        %s1669 = scalar_lea.vmem [#allocation5], 576
        %v1670 = vld [vmem:[%s1669] sm:$0xf]
        %v1671 = vld [vmem:[%s1669 + $0x4] sm:$0xf]
        %v1672 = vld [vmem:[%s1669 + $0x8] sm:$0xf]
        %v1673 = vld [vmem:[%s1669 + $0xc] sm:$0xf]
        %v1674 = vld [vmem:[%s1669 + $0x10] sm:$0xf]
        %v1675 = vld [vmem:[%s1669 + $0x14] sm:$0xf]
        %v1676 = vld [vmem:[%s1669 + $0x18] sm:$0xf]
        %v1677 = vld [vmem:[%s1669 + $0x1c] sm:$0xf]
        %v1678 = vld [vmem:[%s1669 + $0x20] sm:$0xf]
        %v1679 = vld [vmem:[%s1669 + $0x24] sm:$0xf]
        %v1680 = vld [vmem:[%s1669 + $0x28] sm:$0xf]
        %v1681 = vld [vmem:[%s1669 + $0x2c] sm:$0xf]
        %v1682 = vld [vmem:[%s1669 + $0x30] sm:$0xf]
        %v1683 = vld [vmem:[%s1669 + $0x34] sm:$0xf]
        %v1684 = vld [vmem:[%s1669 + $0x38] sm:$0xf]
        %v1685 = vld [vmem:[%s1669 + $0x3c] sm:$0xf]
        %s1686 = scalar_lea.vmem [#allocation7], 9
        %v1687 = vld [vmem:[%s1686] sm:$0x1]
        %v1689 = vlaneseq
        %v1690 = vshrl.u32 %v1689, 7
        %v1691 = vsub.s32 0, %v1690
        %v1692 = vrot.slane %v1687, %v1691
        %v1710 = vunpack.c.l.b16 %v1670
        %v1711 = vunpack.c.l.b16 %v1671
        %v1712 = vunpack.c.l.b16 %v1672
        %v1713 = vunpack.c.l.b16 %v1673
        %v1714 = vunpack.c.l.b16 %v1674
        %v1715 = vunpack.c.l.b16 %v1675
        %v1716 = vunpack.c.l.b16 %v1676
        %v1717 = vunpack.c.l.b16 %v1677
        %v1718 = vunpack.c.l.b16 %v1678
        %v1719 = vunpack.c.l.b16 %v1679
        %v1720 = vunpack.c.l.b16 %v1680
        %v1721 = vunpack.c.l.b16 %v1681
        %v1722 = vunpack.c.l.b16 %v1682
        %v1723 = vunpack.c.l.b16 %v1683
        %v1724 = vunpack.c.l.b16 %v1684
        %v1725 = vunpack.c.l.b16 %v1685
        %v1726 = vpack.c.b16 %v1711, %v1710
        %v1727 = vpack.c.b16 %v1713, %v1712
        %v1728 = vpack.c.b16 %v1715, %v1714
        %v1729 = vpack.c.b16 %v1717, %v1716
        %v1730 = vpack.c.b16 %v1719, %v1718
        %v1731 = vpack.c.b16 %v1721, %v1720
        %v1732 = vpack.c.b16 %v1723, %v1722
        %v1733 = vpack.c.b16 %v1725, %v1724
        %1742 = vmatprep.subr.bf16.mxu0 0
        %1743 = vmatpush1.bf16.msra.mxu0 %v1726
        %1744 = vmatprep.subr.bf16.mxu0 0
        %1745 = vmatpush1.bf16.msra.mxu0 %v1727
        %1746 = vmatprep.subr.bf16.mxu0 0
        %1747 = vmatpush1.bf16.msra.mxu0 %v1728
        %1748 = vmatprep.subr.bf16.mxu0 0
        %1749 = vmatpush1.bf16.msra.mxu0 %v1729
        %1750 = vmatprep.subr.bf16.mxu0 0
        %1751 = vmatpush1.bf16.msra.mxu0 %v1730
        %1752 = vmatprep.subr.bf16.mxu0 0
        %1753 = vmatpush1.bf16.msra.mxu0 %v1731
        %1754 = vmatprep.subr.bf16.mxu0 0
        %1755 = vmatpush1.bf16.msra.mxu0 %v1732
        %1756 = vmatprep.subr.bf16.mxu0 0
        %1757 = vmatpush1.bf16.msra.mxu0 %v1733
        %1758 = vmatprep.subr.bf16.mxu0 0
        %1759 = vmatpush1.bf16.msra.mxu0 0
        %1760 = vmatprep.subr.bf16.mxu0 0
        %1761 = vmatpush1.bf16.msra.mxu0 0
        %1762 = vmatprep.subr.bf16.mxu0 0
        %1763 = vmatpush1.bf16.msra.mxu0 0
        %1764 = vmatprep.subr.bf16.mxu0 0
        %1765 = vmatpush1.bf16.msra.mxu0 0
        %1766 = vmatprep.subr.bf16.mxu0 0
        %1767 = vmatpush1.bf16.msra.mxu0 0
        %1768 = vmatprep.subr.bf16.mxu0 0
        %1769 = vmatpush1.bf16.msra.mxu0 0
        %1770 = vmatprep.subr.bf16.mxu0 0
        %1771 = vmatpush1.bf16.msra.mxu0 0
        %1772 = vmatprep.subr.bf16.mxu0 0
        %1773 = vmatpush1.bf16.msra.mxu0 0
        %1774 = vmatprep.mubr.bf16.mxu0 0
        %1775 = vmatmul.mubr.bf16.gmra.mrb[0].mxu0 %v1665
        %v1776 = vpop.f32.mrb[0].mxu0
        %v1777 = vadd.f32 %v1692, %v1776
        %v1778 = vpop.f32.mrb[0].mxu0
        %v1779 = vpop.f32.mrb[0].mxu0
        %v1780 = vadd.f32 %v1692, %v1779
        %v1781 = vpop.f32.mrb[0].mxu0
        %1782 = vmatprep.mubr.bf16.mxu0 0
        %1783 = vmatmul.mubr.bf16.gmra.mrb[0].mxu0 %v1666
        %v1784 = vpop.f32.mrb[0].mxu0
        %v1785 = vadd.f32 %v1692, %v1784
        %v1786 = vpop.f32.mrb[0].mxu0
        %v1787 = vpop.f32.mrb[0].mxu0
        %v1788 = vadd.f32 %v1692, %v1787
        %v1789 = vpop.f32.mrb[0].mxu0
        %1790 = vmatprep.mubr.bf16.mxu0 0
        %1791 = vmatmul.mubr.bf16.gmra.mrb[0].mxu0 %v1667
        %v1792 = vpop.f32.mrb[0].mxu0
        %v1793 = vadd.f32 %v1692, %v1792
        %v1794 = vpop.f32.mrb[0].mxu0
        %v1795 = vpop.f32.mrb[0].mxu0
        %v1796 = vadd.f32 %v1692, %v1795
        %v1797 = vpop.f32.mrb[0].mxu0
        %1798 = vmatprep.mubr.bf16.mxu0 0
        %1799 = vmatmul.mubr.bf16.gmra.mrb[0].mxu0 %v1668
        %v1800 = vpop.f32.mrb[0].mxu0
        %v1801 = vadd.f32 %v1692, %v1800
        %v1802 = vpop.f32.mrb[0].mxu0
        %v1803 = vpop.f32.mrb[0].mxu0
        %v1804 = vadd.f32 %v1692, %v1803
        %v1805 = vpop.f32.mrb[0].mxu0
        %1806 = vdwg.mxu0
        %v1807 = vadd.f32 %v1777, %v959
        %v1808 = vadd.f32 %v1780, %v962
        %v1809 = vadd.f32 %v1785, %v967
        %v1810 = vadd.f32 %v1788, %v970
        %v1811 = vadd.f32 %v1793, %v975
        %v1812 = vadd.f32 %v1796, %v978
        %v1813 = vadd.f32 %v1801, %v983
        %v1814 = vadd.f32 %v1804, %v986
        %1815 = vst [vmem:[%s217] sm:$0xff] %v1807
        %1816 = vst [vmem:[%s217 + $0x8] sm:$0xff] %v1808
        %1817 = vst [vmem:[%s217 + $0x10] sm:$0xff] %v1809
        %1818 = vst [vmem:[%s217 + $0x18] sm:$0xff] %v1810
        %1819 = vst [vmem:[%s217 + $0x20] sm:$0xff] %v1811
        %1820 = vst [vmem:[%s217 + $0x28] sm:$0xff] %v1812
        %1821 = vst [vmem:[%s217 + $0x30] sm:$0xff] %v1813
        %1822 = vst [vmem:[%s217 + $0x38] sm:$0xff] %v1814
        %s1823 = sand.u32 %s97, 1
        %s1824 = scalar_lea.sflag [#allocation4], %s1823
        %s1825 = sand.u32 %s97, 1
        %s1826 = smul.addr %s1825, 64
        %s1827 = scalar_lea.vmem [#allocation8], %s1826
        // Predicated region
        $region45: #{tpu_custom_call.1} parent=31 // pred_check
          %p1828 = pneg %p107
        $region46: #{tpu_custom_call.1} parent=31 // pred_check_branch
          %1830 = sbr.rel (%p1828) target = $region48
        $region47: #{tpu_custom_call.1} parent=31 // pred_region
          %s1831 = smul.u32 8, %s21
          %s1833 = ssub.s32 1024, 1024
          %1834 = vsyncadd %s1824, %s1833
          %s1835 = smul.addr %s1831, 128
          %s1836 = scalar_lea.hbm %s3, %s1835
          %s1837 = sshll.u32 %s1827, 4
          %s1838 = int_to_ptr.vmem [resolvable:$true] %s1837
          %1843 = dma.vmem_to_hbm [thread:$0]  %s1838, 1024, %s1836, %s1824, 128, 128, 8
        $region48: #{tpu_custom_call.1} parent=31 // pred_fallthru
          _
      $region32: #{tpu_custom_call.1} parent=5 // pred_fallthru
        _
      %p1844 = scmp.le.s32.totalorder 2, %s16
      // Predicated region
      $region49: #{tpu_custom_call.1} parent=5 // pred_check
        %p1845 = pneg %p1844
      $region50: #{tpu_custom_call.1} parent=5 // pred_check_branch
        %1847 = sbr.rel (%p1845) target = $region52
      $region51: #{tpu_custom_call.1} parent=5 // pred_region
        %s1848 = ssub.s32 %s16, 2
        // Predicated region
        $region53: #{tpu_custom_call.1} parent=51 // pred_check
          %p1849 = pneg %p113
        $region54: #{tpu_custom_call.1} parent=51 // pred_check_branch
          %1851 = sbr.rel (%p1849) target = $region56
        $region55: #{tpu_custom_call.1} parent=51 // pred_region
          %s1852 = sand.u32 %s98, 1
          %s1853 = scalar_lea.sflag [#allocation4], %s1852
          %s1854 = sand.u32 %s98, 1
          %s1855 = smul.addr %s1854, 64
          %s1856 = scalar_lea.vmem [#allocation8], %s1855
          %1857 = dma.done %s1853, 1024
        $region56: #{tpu_custom_call.1} parent=51 // pred_fallthru
          _
      $region52: #{tpu_custom_call.1} parent=5 // pred_fallthru
        _
    $region6: #{tpu_custom_call.1} parent=1 // loop_footer
      %s20 = sadd.s32 1, %s16
    $region7: #{tpu_custom_call.1} parent=1 // loop_footer_branch
      %15 = sbr.rel target = $region3
    $region8: #{tpu_custom_call.1} parent=1 // loop_exit
      _
    %1858 = vsyncpa [#allocation3], 1
    %s1859 = scalar_lea.sflag [#allocation3], 1
    %1860 = vsyncpa %s1859, 1
    %1861 = vsyncpa [#allocation6], 1
    %1862 = vsyncpa [#allocation4], 1
    %s1863 = scalar_lea.sflag [#allocation4], 1
    %1864 = vsyncpa %s1863, 1

</llo_original>
